<compile_context>
chip_gen: v7x
topology: tpu7x:2x2x1
jax: 0.10.0
libtpu: 0.0.40
codegen_flags: <defaults>
</compile_context>

<pallas_src>
import functools
import math

import jax
import jax.numpy as jnp
from jax.experimental import pallas as pl
from jax.experimental.pallas import tpu as pltpu


# ----------------------------------------------------------------------------
# helpers
# ----------------------------------------------------------------------------

def _round_up(a, m):
    return (a + m - 1) // m * m


def _sublane_pack(dtype):
    # rows per packed sublane group: 8 (f32), 16 (bf16), 32 (int8/fp8)
    return max(8, 32 // jnp.dtype(dtype).itemsize)


def _tpu_vmem_capacity_bytes():
    try:
        return int(pltpu.get_tpu_info().vmem_capacity_bytes)
    except Exception:
        return 64 * 1024 * 1024  # conservative (v7x-sized) default


def _vmem_budget_bytes():
    # ~60% of physical VMEM, capped at 48 MiB: 48 MiB on 128 MiB parts
    # (v5e/v6e), ~38 MiB on v7x so the compiler keeps spill headroom.
    cap = _tpu_vmem_capacity_bytes()
    return min(48 * 1024 * 1024, cap * 3 // 5)


# ----------------------------------------------------------------------------
# primary path: in-kernel tap slicing (no HBM im2col)
# ----------------------------------------------------------------------------

def _conv_taps_kernel(x_ref, w_ref, o_ref, *, kh_size, kw_size, stride, oh, owp):
    """One (M-group, OC-tile) output block.

    x_ref: (bB, H, Wp, C)   NHWC image slab (W zero-padded)
    w_ref: (kH, kW, C, tN)  HWIO weights (OC zero-padded, lane-dense)
    o_ref: (bB*oH*oWp, tN)  flattened output rows
    """
    bB = x_ref.shape[0]
    c = x_ref.shape[3]
    m_rows = bB * oh * owp
    acc = jnp.zeros((m_rows, o_ref.shape[1]), jnp.float32)
    for kh in range(kh_size):
        rows = pl.ds(kh, oh) if stride == 1 else pl.ds(kh, oh, stride)
        for kw in range(kw_size):
            cols = pl.ds(kw, owp) if stride == 1 else pl.ds(kw, owp, stride)
            x_tap = x_ref[:, rows, cols, :]            # (bB, oH, oWp, C)
            x2d = jnp.reshape(x_tap, (m_rows, c))      # layout-preserving collapse
            acc = acc + jnp.dot(x2d, w_ref[kh, kw],
                                preferred_element_type=jnp.float32)
    o_ref[...] = acc.astype(o_ref.dtype)


def _conv2d_taps_path(x_nhwc, w_hwio, stride, oH, oW, budget):
    B, H, W, C = x_nhwc.shape
    kH, kW, _, OC = w_hwio.shape
    dtype = x_nhwc.dtype
    itemsize = jnp.dtype(dtype).itemsize
    pack = _sublane_pack(dtype)

    # sublane-aligned output width; pad W so every tap read stays in bounds
    oWp = _round_up(oW, pack)
    Wp = _round_up(max(W, (oWp - 1) * stride + kW), pack)

    # lane-dense OC tiling
    OCp = _round_up(OC, 128)
    tN = OCp if OCp <= 512 else 256
    OCp = _round_up(OC, tN)
    grid_n = OCp // tN

    # fold batch into M: aim for ~256 MXU rows per block, but keep >=2
    # parallel blocks so a 2-TC chip (v7x) gets both cores busy.
    rows_per_image = oH * oWp
    bB = max(1, min(B, 256 // max(1, rows_per_image)))
    if grid_n == 1 and B >= 2:
        bB = min(bB, (B + 1) // 2)

    def _vmem_est(tn, bb):
        x_blk = bb * H * Wp * C * itemsize
        w_blk = kH * kW * C * tn * itemsize
        o_blk = bb * oH * oWp * tn * itemsize
        acc_b = bb * oH * oWp * tn * 4
        return 2 * (x_blk + w_blk + o_blk) + acc_b  # 2x: double-buffered pipeline

    while _vmem_est(tN, bB) > budget and tN > 128:
        tN = max(128, _round_up(tN // 2, 128))
    while _vmem_est(tN, bB) > budget and bB > 1:
        bB = max(1, bB // 2)
    if _vmem_est(tN, bB) > budget:
        return None  # slabs don't fit -> caller uses the K-streaming GEMM path

    OCp = _round_up(OC, tN)
    grid_n = OCp // tN
    Bp = _round_up(B, bB)
    grid_m = Bp // bB

    x_p = jnp.pad(x_nhwc, ((0, Bp - B), (0, 0), (0, Wp - W), (0, 0)))
    w_p = jnp.pad(w_hwio, ((0, 0), (0, 0), (0, 0), (0, OCp - OC)))

    # grid order: keep whichever operand would otherwise be re-read the most
    # resident (its block index constant along the inner grid axis).
    x_bytes = Bp * H * Wp * C * itemsize
    w_bytes = kH * kW * C * OCp * itemsize
    n_outer = (grid_n - 1) * x_bytes <= (grid_m - 1) * w_bytes
    if n_outer:
        grid = (grid_n, grid_m)
        x_map = lambda n, g: (g, 0, 0, 0)
        w_map = lambda n, g: (0, 0, 0, n)
        o_map = lambda n, g: (g, n)
    else:
        grid = (grid_m, grid_n)
        x_map = lambda g, n: (g, 0, 0, 0)
        w_map = lambda g, n: (0, 0, 0, n)
        o_map = lambda g, n: (g, n)

    kernel = functools.partial(_conv_taps_kernel, kh_size=kH, kw_size=kW,
                               stride=stride, oh=oH, owp=oWp)

    flops = 2 * B * oH * oW * OC * kH * kW * C
    bytes_accessed = int(x_p.size + w_p.size + Bp * oH * oWp * OCp) * itemsize

    out_flat = pl.pallas_call(
        kernel,
        out_shape=jax.ShapeDtypeStruct((Bp * oH * oWp, OCp), dtype),
        grid=grid,
        in_specs=[pl.BlockSpec((bB, H, Wp, C), x_map),
                  pl.BlockSpec((kH, kW, C, tN), w_map)],
        out_specs=pl.BlockSpec((bB * oH * oWp, tN), o_map),
        compiler_params=pltpu.CompilerParams(
            dimension_semantics=("parallel", "parallel"),
            vmem_limit_bytes=budget),
        cost_estimate=pl.CostEstimate(flops=flops, transcendentals=0,
                                      bytes_accessed=bytes_accessed),
    )(x_p, w_p)

    out = out_flat.reshape(Bp, oH, oWp, OCp)[:B, :, :oW, :OC]
    return out  # NHWC


# ----------------------------------------------------------------------------
# fallback path: im2col + K-streaming GEMM (f32 accumulator scratch)
# ----------------------------------------------------------------------------

def _gemm_k_stream_kernel(p_ref, w_ref, o_ref, acc_ref):
    @pl.when(pl.program_id(2) == 0)
    def _init():
        acc_ref[...] = jnp.zeros_like(acc_ref)

    acc_ref[...] += jnp.dot(p_ref[...], w_ref[...],
                            preferred_element_type=jnp.float32)

    @pl.when(pl.program_id(2) == pl.num_programs(2) - 1)
    def _store():
        o_ref[...] = acc_ref[...].astype(o_ref.dtype)


def _conv2d_im2col_path(x_nhwc, w_hwio, stride, oH, oW, budget):
    # TODO(synk): this path still materializes the patch matrix in HBM; it is
    # only used when the in-kernel tap path does not fit the VMEM budget (or
    # fails to lower on a given backend/version).
    B, H, W, C = x_nhwc.shape
    kH, kW, _, OC = w_hwio.shape
    dtype = x_nhwc.dtype
    itemsize = jnp.dtype(dtype).itemsize
    pack = _sublane_pack(dtype)

    oHW = oH * oW
    M = B * oHW                      # batch folded into M
    K = kH * kW * C

    taps = []
    for kh in range(kH):
        for kw in range(kW):
            v = x_nhwc[:, kh: kh + (oH - 1) * stride + 1: stride,
                          kw: kw + (oW - 1) * stride + 1: stride, :]
            taps.append(v.reshape(B, oHW, C))
    patches = jnp.concatenate(taps, axis=-1).reshape(M, K)
    w2 = w_hwio.reshape(K, OC)

    OCp = _round_up(OC, 128)
    tN = OCp if OCp <= 512 else 256
    OCp = _round_up(OC, tN)

    Mp0 = _round_up(M, pack)
    tM = min(Mp0, 256)
    Mp = _round_up(M, tM)

    Kp0 = _round_up(K, 128)          # dense 128-multiple K
    tK = min(Kp0, 2048)

    def _est(tk):
        return 2 * (tM * tk + tk * tN + tM * tN) * itemsize + tM * tN * 4

    while _est(tK) > budget and tK > 128:
        tK = max(128, _round_up(tK // 2, 128))
    Kp = _round_up(K, tK)

    patches_p = jnp.pad(patches, ((0, Mp - M), (0, Kp - K)))
    w2_p = jnp.pad(w2, ((0, Kp - K), (0, OCp - OC)))

    flops = 2 * M * OC * K
    bytes_accessed = int(patches_p.size + w2_p.size + Mp * OCp) * itemsize

    out_p = pl.pallas_call(
        _gemm_k_stream_kernel,
        out_shape=jax.ShapeDtypeStruct((Mp, OCp), dtype),
        grid=(Mp // tM, OCp // tN, Kp // tK),
        in_specs=[pl.BlockSpec((tM, tK), lambda m, n, k: (m, k)),
                  pl.BlockSpec((tK, tN), lambda m, n, k: (k, n))],
        out_specs=pl.BlockSpec((tM, tN), lambda m, n, k: (m, n)),
        scratch_shapes=[pltpu.VMEM((tM, tN), jnp.float32)],
        compiler_params=pltpu.CompilerParams(
            dimension_semantics=("parallel", "parallel", "arbitrary"),
            vmem_limit_bytes=budget),
        cost_estimate=pl.CostEstimate(flops=flops, transcendentals=0,
                                      bytes_accessed=bytes_accessed),
    )(patches_p, w2_p)

    out = out_p[:M, :OC].reshape(B, oH, oW, OC)
    return out  # NHWC


# ----------------------------------------------------------------------------
# public wrapper (PyTorch Conv2D.forward semantics)
# ----------------------------------------------------------------------------

def conv2d_pallas(x_nchw, weight_oihw, stride):
    """Valid (no-padding) 2D convolution, semantics of PyTorch Conv2D.forward."""
    B, C, H, W = x_nchw.shape
    OC, C_w, kH, kW = weight_oihw.shape
    assert C == C_w, "input channels must match weight channels"
    oH = (H - kH) // stride + 1
    oW = (W - kW) // stride + 1

    x_nhwc = jnp.transpose(x_nchw, (0, 2, 3, 1))        # (B, H, W, C)
    w_hwio = jnp.transpose(weight_oihw, (2, 3, 1, 0))   # (kH, kW, C, OC)

    budget = _vmem_budget_bytes()

    out_nhwc = None
    try:
        out_nhwc = _conv2d_taps_path(x_nhwc, w_hwio, stride, oH, oW, budget)
        if out_nhwc is not None:
            out_nhwc = jax.block_until_ready(out_nhwc)
    except Exception:
        out_nhwc = None  # safety net: fall back to the im2col GEMM path
    if out_nhwc is None:
        out_nhwc = _conv2d_im2col_path(x_nhwc, w_hwio, stride, oH, oW, budget)

    return jnp.transpose(out_nhwc, (0, 3, 1, 2))         # NCHW


def init_conv2d_weight(key, out_channels, in_channels, kH, kW, dtype=jnp.float32):
    """Deterministic kaiming_uniform_ (a=0, fan_in, leaky_relu) like the module."""
    fan_in = in_channels * kH * kW
    gain = math.sqrt(2.0)
    bound = gain * math.sqrt(3.0 / fan_in)
    return jax.random.uniform(
        key, (out_channels, in_channels, kH, kW), dtype=dtype,
        minval=-bound, maxval=bound)


if __name__ == "__main__":
    # Conv2D(in_channels=4, out_channels=8, kernel_size=3, stride=2) on
    # x of shape (2, 4, 16, 16).
    B, C, H, W = 2, 4, 16, 16
    OC, kH, kW = 8, 3, 3
    stride = 2

    key = jax.random.PRNGKey(0)
    kx, kw_ = jax.random.split(key)
    x = jax.random.normal(kx, (B, C, H, W), dtype=jnp.float32)
    weight = init_conv2d_weight(kw_, OC, C, kH, kW, dtype=jnp.float32)

    out = conv2d_pallas(x, weight, stride)
    out = jax.block_until_ready(out)

    ref = jax.lax.conv_general_dilated(
        x, weight, window_strides=(stride, stride), padding="VALID",
        dimension_numbers=("NCHW", "OIHW", "NCHW"))
    assert out.shape == (B, OC, (H - kH) // stride + 1, (W - kW) // stride + 1)
    assert jnp.allclose(out, ref, atol=1e-4, rtol=1e-4), "mismatch vs reference conv"

    print("KERNEL_OK")
</pallas_src>

<mosaic_0001>
module attributes {stable_mosaic.version = 11 : i64} {
  func.func @_conv_taps_kernel(%arg0: i32, %arg1: i32, %arg2: memref<1x16x24x4xf32, #tpu.memory_space<vmem>>, %arg3: memref<3x3x4x128xf32, #tpu.memory_space<vmem>>, %arg4: memref<56x128xf32, #tpu.memory_space<vmem>>) attributes {dimension_semantics = [#tpu.dimension_semantics<parallel>, #tpu.dimension_semantics<parallel>], iteration_bounds = array<i64: 1, 2>, scalar_prefetch = 0 : i64, scratch_operands = 0 : i64, tpu.core_type = #tpu.core_type<tc>, window_params = [{transform_indices = @transform_0, window_bounds = array<i64: 1, 16, 24, 4>}, {transform_indices = @transform_1, window_bounds = array<i64: 3, 3, 4, 128>}, {transform_indices = @transform_2, window_bounds = array<i64: 56, 128>}]} {
    %cst = arith.constant 0.000000e+00 : f32
    %0 = vector.broadcast %cst : f32 to vector<56x128xf32>
    %c0 = arith.constant 0 : index
    %c0_0 = arith.constant 0 : index
    %c0_1 = arith.constant 0 : index
    %c0_2 = arith.constant 0 : index
    %1 = tpu.strided_load %arg2[%c0, %c0_0, %c0_1, %c0_2] {strides = array<i32: 1, 2, 2, 1>} : memref<1x16x24x4xf32, #tpu.memory_space<vmem>>, vector<1x7x8x4xf32>
    %2 = vector.shape_cast %1 : vector<1x7x8x4xf32> to vector<56x4xf32>
    %c0_3 = arith.constant 0 : index
    %c0_4 = arith.constant 0 : index
    %c0_5 = arith.constant 0 : index
    %c0_6 = arith.constant 0 : index
    %3 = vector.load %arg3[%c0_3, %c0_4, %c0_5, %c0_6] : memref<3x3x4x128xf32, #tpu.memory_space<vmem>>, vector<1x1x4x128xf32>
    %4 = vector.shape_cast %3 : vector<1x1x4x128xf32> to vector<4x128xf32>
    %cst_7 = arith.constant dense<0.000000e+00> : vector<56x128xf32>
    %5 = tpu.matmul %2, %4, %cst_7 {dimension_numbers = #tpu.dot_dimension_numbers<[1], [0], [0], [1], [0, 0, 1, 1], [], []>} : vector<56x4xf32>, vector<4x128xf32>, vector<56x128xf32> -> vector<56x128xf32>
    %6 = arith.addf %0, %5 : vector<56x128xf32>
    %c0_8 = arith.constant 0 : index
    %c0_9 = arith.constant 0 : index
    %c1 = arith.constant 1 : index
    %c0_10 = arith.constant 0 : index
    %7 = tpu.strided_load %arg2[%c0_8, %c0_9, %c1, %c0_10] {strides = array<i32: 1, 2, 2, 1>} : memref<1x16x24x4xf32, #tpu.memory_space<vmem>>, vector<1x7x8x4xf32>
    %8 = vector.shape_cast %7 : vector<1x7x8x4xf32> to vector<56x4xf32>
    %c0_11 = arith.constant 0 : index
    %c1_12 = arith.constant 1 : index
    %c0_13 = arith.constant 0 : index
    %c0_14 = arith.constant 0 : index
    %9 = vector.load %arg3[%c0_11, %c1_12, %c0_13, %c0_14] : memref<3x3x4x128xf32, #tpu.memory_space<vmem>>, vector<1x1x4x128xf32>
    %10 = vector.shape_cast %9 : vector<1x1x4x128xf32> to vector<4x128xf32>
    %cst_15 = arith.constant dense<0.000000e+00> : vector<56x128xf32>
    %11 = tpu.matmul %8, %10, %cst_15 {dimension_numbers = #tpu.dot_dimension_numbers<[1], [0], [0], [1], [0, 0, 1, 1], [], []>} : vector<56x4xf32>, vector<4x128xf32>, vector<56x128xf32> -> vector<56x128xf32>
    %12 = arith.addf %6, %11 : vector<56x128xf32>
    %c0_16 = arith.constant 0 : index
    %c0_17 = arith.constant 0 : index
    %c2 = arith.constant 2 : index
    %c0_18 = arith.constant 0 : index
    %13 = tpu.strided_load %arg2[%c0_16, %c0_17, %c2, %c0_18] {strides = array<i32: 1, 2, 2, 1>} : memref<1x16x24x4xf32, #tpu.memory_space<vmem>>, vector<1x7x8x4xf32>
    %14 = vector.shape_cast %13 : vector<1x7x8x4xf32> to vector<56x4xf32>
    %c0_19 = arith.constant 0 : index
    %c2_20 = arith.constant 2 : index
    %c0_21 = arith.constant 0 : index
    %c0_22 = arith.constant 0 : index
    %15 = vector.load %arg3[%c0_19, %c2_20, %c0_21, %c0_22] : memref<3x3x4x128xf32, #tpu.memory_space<vmem>>, vector<1x1x4x128xf32>
    %16 = vector.shape_cast %15 : vector<1x1x4x128xf32> to vector<4x128xf32>
    %cst_23 = arith.constant dense<0.000000e+00> : vector<56x128xf32>
    %17 = tpu.matmul %14, %16, %cst_23 {dimension_numbers = #tpu.dot_dimension_numbers<[1], [0], [0], [1], [0, 0, 1, 1], [], []>} : vector<56x4xf32>, vector<4x128xf32>, vector<56x128xf32> -> vector<56x128xf32>
    %18 = arith.addf %12, %17 : vector<56x128xf32>
    %c0_24 = arith.constant 0 : index
    %c1_25 = arith.constant 1 : index
    %c0_26 = arith.constant 0 : index
    %c0_27 = arith.constant 0 : index
    %19 = tpu.strided_load %arg2[%c0_24, %c1_25, %c0_26, %c0_27] {strides = array<i32: 1, 2, 2, 1>} : memref<1x16x24x4xf32, #tpu.memory_space<vmem>>, vector<1x7x8x4xf32>
    %20 = vector.shape_cast %19 : vector<1x7x8x4xf32> to vector<56x4xf32>
    %c1_28 = arith.constant 1 : index
    %c0_29 = arith.constant 0 : index
    %c0_30 = arith.constant 0 : index
    %c0_31 = arith.constant 0 : index
    %21 = vector.load %arg3[%c1_28, %c0_29, %c0_30, %c0_31] : memref<3x3x4x128xf32, #tpu.memory_space<vmem>>, vector<1x1x4x128xf32>
    %22 = vector.shape_cast %21 : vector<1x1x4x128xf32> to vector<4x128xf32>
    %cst_32 = arith.constant dense<0.000000e+00> : vector<56x128xf32>
    %23 = tpu.matmul %20, %22, %cst_32 {dimension_numbers = #tpu.dot_dimension_numbers<[1], [0], [0], [1], [0, 0, 1, 1], [], []>} : vector<56x4xf32>, vector<4x128xf32>, vector<56x128xf32> -> vector<56x128xf32>
    %24 = arith.addf %18, %23 : vector<56x128xf32>
    %c0_33 = arith.constant 0 : index
    %c1_34 = arith.constant 1 : index
    %c1_35 = arith.constant 1 : index
    %c0_36 = arith.constant 0 : index
    %25 = tpu.strided_load %arg2[%c0_33, %c1_34, %c1_35, %c0_36] {strides = array<i32: 1, 2, 2, 1>} : memref<1x16x24x4xf32, #tpu.memory_space<vmem>>, vector<1x7x8x4xf32>
    %26 = vector.shape_cast %25 : vector<1x7x8x4xf32> to vector<56x4xf32>
    %c1_37 = arith.constant 1 : index
    %c1_38 = arith.constant 1 : index
    %c0_39 = arith.constant 0 : index
    %c0_40 = arith.constant 0 : index
    %27 = vector.load %arg3[%c1_37, %c1_38, %c0_39, %c0_40] : memref<3x3x4x128xf32, #tpu.memory_space<vmem>>, vector<1x1x4x128xf32>
    %28 = vector.shape_cast %27 : vector<1x1x4x128xf32> to vector<4x128xf32>
    %cst_41 = arith.constant dense<0.000000e+00> : vector<56x128xf32>
    %29 = tpu.matmul %26, %28, %cst_41 {dimension_numbers = #tpu.dot_dimension_numbers<[1], [0], [0], [1], [0, 0, 1, 1], [], []>} : vector<56x4xf32>, vector<4x128xf32>, vector<56x128xf32> -> vector<56x128xf32>
    %30 = arith.addf %24, %29 : vector<56x128xf32>
    %c0_42 = arith.constant 0 : index
    %c1_43 = arith.constant 1 : index
    %c2_44 = arith.constant 2 : index
    %c0_45 = arith.constant 0 : index
    %31 = tpu.strided_load %arg2[%c0_42, %c1_43, %c2_44, %c0_45] {strides = array<i32: 1, 2, 2, 1>} : memref<1x16x24x4xf32, #tpu.memory_space<vmem>>, vector<1x7x8x4xf32>
    %32 = vector.shape_cast %31 : vector<1x7x8x4xf32> to vector<56x4xf32>
    %c1_46 = arith.constant 1 : index
    %c2_47 = arith.constant 2 : index
    %c0_48 = arith.constant 0 : index
    %c0_49 = arith.constant 0 : index
    %33 = vector.load %arg3[%c1_46, %c2_47, %c0_48, %c0_49] : memref<3x3x4x128xf32, #tpu.memory_space<vmem>>, vector<1x1x4x128xf32>
    %34 = vector.shape_cast %33 : vector<1x1x4x128xf32> to vector<4x128xf32>
    %cst_50 = arith.constant dense<0.000000e+00> : vector<56x128xf32>
    %35 = tpu.matmul %32, %34, %cst_50 {dimension_numbers = #tpu.dot_dimension_numbers<[1], [0], [0], [1], [0, 0, 1, 1], [], []>} : vector<56x4xf32>, vector<4x128xf32>, vector<56x128xf32> -> vector<56x128xf32>
    %36 = arith.addf %30, %35 : vector<56x128xf32>
    %c0_51 = arith.constant 0 : index
    %c2_52 = arith.constant 2 : index
    %c0_53 = arith.constant 0 : index
    %c0_54 = arith.constant 0 : index
    %37 = tpu.strided_load %arg2[%c0_51, %c2_52, %c0_53, %c0_54] {strides = array<i32: 1, 2, 2, 1>} : memref<1x16x24x4xf32, #tpu.memory_space<vmem>>, vector<1x7x8x4xf32>
    %38 = vector.shape_cast %37 : vector<1x7x8x4xf32> to vector<56x4xf32>
    %c2_55 = arith.constant 2 : index
    %c0_56 = arith.constant 0 : index
    %c0_57 = arith.constant 0 : index
    %c0_58 = arith.constant 0 : index
    %39 = vector.load %arg3[%c2_55, %c0_56, %c0_57, %c0_58] : memref<3x3x4x128xf32, #tpu.memory_space<vmem>>, vector<1x1x4x128xf32>
    %40 = vector.shape_cast %39 : vector<1x1x4x128xf32> to vector<4x128xf32>
    %cst_59 = arith.constant dense<0.000000e+00> : vector<56x128xf32>
    %41 = tpu.matmul %38, %40, %cst_59 {dimension_numbers = #tpu.dot_dimension_numbers<[1], [0], [0], [1], [0, 0, 1, 1], [], []>} : vector<56x4xf32>, vector<4x128xf32>, vector<56x128xf32> -> vector<56x128xf32>
    %42 = arith.addf %36, %41 : vector<56x128xf32>
    %c0_60 = arith.constant 0 : index
    %c2_61 = arith.constant 2 : index
    %c1_62 = arith.constant 1 : index
    %c0_63 = arith.constant 0 : index
    %43 = tpu.strided_load %arg2[%c0_60, %c2_61, %c1_62, %c0_63] {strides = array<i32: 1, 2, 2, 1>} : memref<1x16x24x4xf32, #tpu.memory_space<vmem>>, vector<1x7x8x4xf32>
    %44 = vector.shape_cast %43 : vector<1x7x8x4xf32> to vector<56x4xf32>
    %c2_64 = arith.constant 2 : index
    %c1_65 = arith.constant 1 : index
    %c0_66 = arith.constant 0 : index
    %c0_67 = arith.constant 0 : index
    %45 = vector.load %arg3[%c2_64, %c1_65, %c0_66, %c0_67] : memref<3x3x4x128xf32, #tpu.memory_space<vmem>>, vector<1x1x4x128xf32>
    %46 = vector.shape_cast %45 : vector<1x1x4x128xf32> to vector<4x128xf32>
    %cst_68 = arith.constant dense<0.000000e+00> : vector<56x128xf32>
    %47 = tpu.matmul %44, %46, %cst_68 {dimension_numbers = #tpu.dot_dimension_numbers<[1], [0], [0], [1], [0, 0, 1, 1], [], []>} : vector<56x4xf32>, vector<4x128xf32>, vector<56x128xf32> -> vector<56x128xf32>
    %48 = arith.addf %42, %47 : vector<56x128xf32>
    %c0_69 = arith.constant 0 : index
    %c2_70 = arith.constant 2 : index
    %c2_71 = arith.constant 2 : index
    %c0_72 = arith.constant 0 : index
    %49 = tpu.strided_load %arg2[%c0_69, %c2_70, %c2_71, %c0_72] {strides = array<i32: 1, 2, 2, 1>} : memref<1x16x24x4xf32, #tpu.memory_space<vmem>>, vector<1x7x8x4xf32>
    %50 = vector.shape_cast %49 : vector<1x7x8x4xf32> to vector<56x4xf32>
    %c2_73 = arith.constant 2 : index
    %c2_74 = arith.constant 2 : index
    %c0_75 = arith.constant 0 : index
    %c0_76 = arith.constant 0 : index
    %51 = vector.load %arg3[%c2_73, %c2_74, %c0_75, %c0_76] : memref<3x3x4x128xf32, #tpu.memory_space<vmem>>, vector<1x1x4x128xf32>
    %52 = vector.shape_cast %51 : vector<1x1x4x128xf32> to vector<4x128xf32>
    %cst_77 = arith.constant dense<0.000000e+00> : vector<56x128xf32>
    %53 = tpu.matmul %50, %52, %cst_77 {dimension_numbers = #tpu.dot_dimension_numbers<[1], [0], [0], [1], [0, 0, 1, 1], [], []>} : vector<56x4xf32>, vector<4x128xf32>, vector<56x128xf32> -> vector<56x128xf32>
    %54 = arith.addf %48, %53 : vector<56x128xf32>
    %c0_78 = arith.constant 0 : index
    %c0_79 = arith.constant 0 : index
    %55 = vector.load %arg4[%c0_78, %c0_79] : memref<56x128xf32, #tpu.memory_space<vmem>>, vector<56x128xf32>
    tpu.vector_store %arg4[%c0_78, %c0_79], %54 {strides = array<i32>} : memref<56x128xf32, #tpu.memory_space<vmem>>, vector<56x128xf32>,
    return
  }
  func.func @transform_0(%arg0: i32, %arg1: i32) -> (i32, i32, i32, i32) {
    %c0_i32 = arith.constant 0 : i32
    %c0_i32_0 = arith.constant 0 : i32
    %c0_i32_1 = arith.constant 0 : i32
    %c0_i32_2 = arith.constant 0 : i32
    return %arg1, %c0_i32, %c0_i32_0, %c0_i32_1 : i32, i32, i32, i32
  }
  func.func @transform_1(%arg0: i32, %arg1: i32) -> (i32, i32, i32, i32) {
    %c0_i32 = arith.constant 0 : i32
    %c0_i32_0 = arith.constant 0 : i32
    %c0_i32_1 = arith.constant 0 : i32
    %c0_i32_2 = arith.constant 0 : i32
    return %c0_i32, %c0_i32_0, %c0_i32_1, %arg0 : i32, i32, i32, i32
  }
  func.func @transform_2(%arg0: i32, %arg1: i32) -> (i32, i32) {
    %c0_i32 = arith.constant 0 : i32
    return %arg1, %arg0 : i32, i32
  }
}

module attributes {stable_mosaic.version = 11 : i64} {
  func.func @_gemm_k_stream_kernel(%arg0: i32, %arg1: i32, %arg2: i32, %arg3: memref<104x128xf32, #tpu.memory_space<vmem>>, %arg4: memref<128x128xf32, #tpu.memory_space<vmem>>, %arg5: memref<104x128xf32, #tpu.memory_space<vmem>>, %arg6: memref<104x128xf32, #tpu.memory_space<vmem>>) attributes {dimension_semantics = [#tpu.dimension_semantics<parallel>, #tpu.dimension_semantics<parallel>, #tpu.dimension_semantics<arbitrary>], iteration_bounds = array<i64: 1, 1, 1>, scalar_prefetch = 0 : i64, scratch_operands = 1 : i64, tpu.core_type = #tpu.core_type<tc>, window_params = [{transform_indices = @transform_0, window_bounds = array<i64: 104, 128>}, {transform_indices = @transform_1, window_bounds = array<i64: 128, 128>}, {transform_indices = @transform_2, window_bounds = array<i64: 104, 128>}]} {
    %c0_i32 = arith.constant 0 : i32
    %0 = arith.cmpi eq, %arg2, %c0_i32 : i32
    %1 = arith.extui %0 : i1 to i32
    %c0_i32_0 = arith.constant 0 : i32
    %2 = arith.cmpi ne, %1, %c0_i32_0 : i32
    scf.if %2 {
      %cst_10 = arith.constant 0.000000e+00 : f32
      %12 = vector.broadcast %cst_10 : f32 to vector<104x128xf32>
      %c0_11 = arith.constant 0 : index
      %c0_12 = arith.constant 0 : index
      %13 = vector.load %arg6[%c0_11, %c0_12] : memref<104x128xf32, #tpu.memory_space<vmem>>, vector<104x128xf32>
      tpu.vector_store %arg6[%c0_11, %c0_12], %12 {strides = array<i32>} : memref<104x128xf32, #tpu.memory_space<vmem>>, vector<104x128xf32>,
    } else {
    }
    %c0 = arith.constant 0 : index
    %c0_1 = arith.constant 0 : index
    %3 = vector.load %arg6[%c0, %c0_1] : memref<104x128xf32, #tpu.memory_space<vmem>>, vector<104x128xf32>
    %c0_2 = arith.constant 0 : index
    %c0_3 = arith.constant 0 : index
    %4 = vector.load %arg3[%c0_2, %c0_3] : memref<104x128xf32, #tpu.memory_space<vmem>>, vector<104x128xf32>
    %c0_4 = arith.constant 0 : index
    %c0_5 = arith.constant 0 : index
    %5 = vector.load %arg4[%c0_4, %c0_5] : memref<128x128xf32, #tpu.memory_space<vmem>>, vector<128x128xf32>
    %cst = arith.constant dense<0.000000e+00> : vector<104x128xf32>
    %6 = tpu.matmul %4, %5, %cst {dimension_numbers = #tpu.dot_dimension_numbers<[1], [0], [0], [1], [0, 0, 1, 1], [], []>} : vector<104x128xf32>, vector<128x128xf32>, vector<104x128xf32> -> vector<104x128xf32>
    %7 = arith.addf %3, %6 : vector<104x128xf32>
    %c0_6 = arith.constant 0 : index
    %c0_7 = arith.constant 0 : index
    %8 = vector.load %arg6[%c0_6, %c0_7] : memref<104x128xf32, #tpu.memory_space<vmem>>, vector<104x128xf32>
    tpu.vector_store %arg6[%c0_6, %c0_7], %7 {strides = array<i32>} : memref<104x128xf32, #tpu.memory_space<vmem>>, vector<104x128xf32>,
    %c0_i32_8 = arith.constant 0 : i32
    %9 = arith.cmpi eq, %arg2, %c0_i32_8 : i32
    %10 = arith.extui %9 : i1 to i32
    %c0_i32_9 = arith.constant 0 : i32
    %11 = arith.cmpi ne, %10, %c0_i32_9 : i32
    scf.if %11 {
      %c0_10 = arith.constant 0 : index
      %c0_11 = arith.constant 0 : index
      %12 = vector.load %arg6[%c0_10, %c0_11] : memref<104x128xf32, #tpu.memory_space<vmem>>, vector<104x128xf32>
      %c0_12 = arith.constant 0 : index
      %c0_13 = arith.constant 0 : index
      %13 = vector.load %arg5[%c0_12, %c0_13] : memref<104x128xf32, #tpu.memory_space<vmem>>, vector<104x128xf32>
      tpu.vector_store %arg5[%c0_12, %c0_13], %12 {strides = array<i32>} : memref<104x128xf32, #tpu.memory_space<vmem>>, vector<104x128xf32>,
    } else {
    }
    return
  }
  func.func @transform_0(%arg0: i32, %arg1: i32, %arg2: i32) -> (i32, i32) {
    %c0_i32 = arith.constant 0 : i32
    return %arg0, %arg2 : i32, i32
  }
  func.func @transform_1(%arg0: i32, %arg1: i32, %arg2: i32) -> (i32, i32) {
    %c0_i32 = arith.constant 0 : i32
    return %arg2, %arg1 : i32, i32
  }
  func.func @transform_2(%arg0: i32, %arg1: i32, %arg2: i32) -> (i32, i32) {
    %c0_i32 = arith.constant 0 : i32
    return %arg0, %arg1 : i32, i32
  }
}

</mosaic_0001>

<llo_original>
// kernel: tpu_custom_call.1
$region0: #{tpu_custom_call.1}
  #allocation0 [shape = 'u32[]', space=smem, size = 0x4, offset = 0x4, fixed_abs, tag = 'smem constant byte address 0x4 - core index']
  #allocation1 [shape = 'u32[144,128]{1,0:T(1,128)}', space=vmem, size = 0x12000, scoped, tag = 'internal scratch']
  %s0 = inlined_call_operand.vmem [shape: f32[2,16,24,4], index: 0, kind: input, shape index: {}]
  %s1 = inlined_call_operand.vmem [shape: f32[3,3,4,128], index: 1, kind: input, shape index: {}]
  %s2 = inlined_call_operand.hbm [shape: f32[112,128], index: 2, kind: output, shape index: {}]
  %s3 = sld [smem:[#allocation0]]
  $region41: #{tpu_custom_call.1} parent=0
    _
  %s5 = ssub.s32 1, %s3
  %s6 = scalar_select 0, %s5, %s3
  $region1: #{tpu_custom_call.1} parent=0
    #allocation2 [shape = 'u8[57344]{0}', space=vmem, size = 0xe000, scoped, tag = 'output window, operand 0']
    #allocation3 [shape = 's32[2]{0}', space=sflag, size = 0x8, scoped, tag = 'scoped memory for tpu_custom_call.1']
    %7 = vsyncpa [#allocation3], 0
    %s8 = scalar_lea.sflag [#allocation3], 1
    %9 = vsyncpa %s8, 0
    loop: start=0, step=1, limit=4
    $region2: #{tpu_custom_call.1} parent=1 // loop_pre_header
      _
    $region3: #{tpu_custom_call.1} parent=1 // loop_header
      %s11 = sphi 0, %s15
      %p12 = scmp.ge.s32.totalorder %s11, 4
      %s18 = sphi 0, %s30
      %s19 = sphi 0, %s26
      %s20 = sphi 0, %s18
      %s21 = sphi 0, %s19
      %s22 = sphi 0, %s20
      %s23 = sphi 0, %s21
      %s33 = sphi 0, %s35
      %s36 = sphi 0, %s33
      %s37 = sphi 0, %s36
      %s53 = sphi 0, %s37
      %s59 = sphi 0, %s61
      %s62 = sphi 0, %s59
      %s63 = sphi 0, %s62
      %s79 = sphi 0, %s63
      %s87 = sphi 0, %s89
      %s90 = sphi 0, %s87
      %s91 = sphi 0, %s90
      %s107 = sphi 0, %s91
    $region4: #{tpu_custom_call.1} parent=1 // loop_header_branch
      %14 = sbr.rel (%p12) target = $region8
    $region5: #{tpu_custom_call.1} parent=1 // loop_body
      %s16 = ssub.s32 %s11, 1
      %s17 = ssub.s32 %s11, 2
      %s24 = sadd.s32 1, %s19
      %p25 = scmp.ge.s32.totalorder %s24, 2
      %s26 = scalar_select %p25, 0, %s24
      %s27 = sadd.s32 1, %s18
      %s28 = scalar_select %p25, %s27, %s18
      %p29 = scmp.ge.s32.totalorder %s28, 1
      %s30 = scalar_select %p29, 0, %s28
      %s31 = ssub.s32 %s19, %s26
      %p32 = scmp.eq.s32.totalorder %s31, 0
      %s34 = sadd.s32 %s33, 1
      %s35 = scalar_select %p32, %s33, %s34
      %p38 = pneg %p32
      %p39 = scmp.eq.s32.totalorder %s11, 1
      %p40 = por %p38, %p39
      %p41 = scmp.ne.s32.totalorder %s33, %s36
      %p42 = scmp.eq.s32.totalorder %s11, 0
      %p43 = por %p41, %p42
      %p44 = scmp.ne.s32.totalorder %s33, %s36
      %p45 = scmp.eq.s32.totalorder %s16, 1
      %p46 = por %p44, %p45
      %p47 = scmp.ne.s32.totalorder %s36, %s37
      %p48 = scmp.eq.s32.totalorder %s16, 0
      %p49 = por %p47, %p48
      %p50 = scmp.ne.s32.totalorder %s36, %s37
      %p51 = scmp.eq.s32.totalorder %s17, 1
      %p52 = por %p50, %p51
      %p54 = scmp.ne.s32.totalorder %s37, %s53
      %p55 = scmp.eq.s32.totalorder %s17, 0
      %p56 = por %p54, %p55
      %s57 = ssub.s32 %s18, %s30
      %p58 = scmp.eq.s32.totalorder %s57, 0
      %s60 = sadd.s32 %s59, 1
      %s61 = scalar_select %p58, %s59, %s60
      %p64 = pneg %p58
      %p65 = scmp.eq.s32.totalorder %s11, 1
      %p66 = por %p64, %p65
      %p67 = scmp.ne.s32.totalorder %s59, %s62
      %p68 = scmp.eq.s32.totalorder %s11, 0
      %p69 = por %p67, %p68
      %p70 = scmp.ne.s32.totalorder %s59, %s62
      %p71 = scmp.eq.s32.totalorder %s16, 1
      %p72 = por %p70, %p71
      %p73 = scmp.ne.s32.totalorder %s62, %s63
      %p74 = scmp.eq.s32.totalorder %s16, 0
      %p75 = por %p73, %p74
      %p76 = scmp.ne.s32.totalorder %s62, %s63
      %p77 = scmp.eq.s32.totalorder %s17, 1
      %p78 = por %p76, %p77
      %p80 = scmp.ne.s32.totalorder %s63, %s79
      %p81 = scmp.eq.s32.totalorder %s17, 0
      %p82 = por %p80, %p81
      %s83 = ssub.s32 %s19, %s26
      %s84 = ssub.s32 %s18, %s30
      %s85 = sor.u32 %s83, %s84
      %p86 = scmp.eq.s32.totalorder %s85, 0
      %s88 = sadd.s32 %s87, 1
      %s89 = scalar_select %p86, %s87, %s88
      %p92 = pneg %p86
      %p93 = scmp.eq.s32.totalorder %s11, 1
      %p94 = por %p92, %p93
      %p95 = scmp.ne.s32.totalorder %s87, %s90
      %p96 = scmp.eq.s32.totalorder %s11, 0
      %p97 = por %p95, %p96
      %p98 = scmp.ne.s32.totalorder %s87, %s90
      %p99 = scmp.eq.s32.totalorder %s16, 1
      %p100 = por %p98, %p99
      %p101 = scmp.ne.s32.totalorder %s90, %s91
      %p102 = scmp.eq.s32.totalorder %s16, 0
      %p103 = por %p101, %p102
      %p104 = scmp.ne.s32.totalorder %s90, %s91
      %p105 = scmp.eq.s32.totalorder %s17, 1
      %p106 = por %p104, %p105
      %p108 = scmp.ne.s32.totalorder %s91, %s107
      %p109 = scmp.eq.s32.totalorder %s17, 0
      %p110 = por %p108, %p109
      %p111 = scmp.le.s32.totalorder 1, %s11
      %p112 = scmp.lt.s32.totalorder %s11, 3
      %p113 = pnand %p111, %p112
      %p114 = pneg %p113
      // Predicated region
      $region9: #{tpu_custom_call.1} parent=5 // pred_check
        _
      $region10: #{tpu_custom_call.1} parent=5 // pred_check_branch
        %116 = sbr.rel (%p113) target = $region12
      $region11: #{tpu_custom_call.1} parent=5 // pred_region
        %s117 = ssub.s32 %s11, 1
        // Predicated region
        $region13: #{tpu_custom_call.1} parent=11 // pred_check
          %p118 = pneg %p75
        $region14: #{tpu_custom_call.1} parent=11 // pred_check_branch
          %120 = sbr.rel (%p118) target = $region16
        $region15: #{tpu_custom_call.1} parent=11 // pred_region
          %p121 = scmp.lt.s32.totalorder %s20, 0
          %s122 = scalar_select %p121, %s20, 0
          %s123 = smul.addr %s122, 4
          %s124 = scalar_lea.vmem %s1, %s123
        $region16: #{tpu_custom_call.1} parent=11 // pred_fallthru
          _
      $region12: #{tpu_custom_call.1} parent=5 // pred_fallthru
        _
      %p125 = scmp.lt.s32.totalorder %s11, 2
      // Predicated region
      $region17: #{tpu_custom_call.1} parent=5 // pred_check
        %p126 = pneg %p125
      $region18: #{tpu_custom_call.1} parent=5 // pred_check_branch
        %128 = sbr.rel (%p126) target = $region20
      $region19: #{tpu_custom_call.1} parent=5 // pred_region
        // Predicated region
        $region21: #{tpu_custom_call.1} parent=19 // pred_check
          %p129 = pneg %p43
        $region22: #{tpu_custom_call.1} parent=19 // pred_check_branch
          %131 = sbr.rel (%p129) target = $region24
        $region23: #{tpu_custom_call.1} parent=19 // pred_region
          %p132 = scmp.lt.s32.totalorder %s19, 1
          %s133 = scalar_select %p132, %s19, 1
          %s134 = smul.addr %s133, 48
          %s135 = smul.addr %s134, 8
          %s136 = scalar_lea.vmem %s0, %s135
        $region24: #{tpu_custom_call.1} parent=19 // pred_fallthru
          _
      $region20: #{tpu_custom_call.1} parent=5 // pred_fallthru
        _
      %p137 = scmp.le.s32.totalorder 1, %s11
      %p138 = scmp.lt.s32.totalorder %s11, 3
      %p139 = pnand %p137, %p138
      %p140 = pneg %p139
      // Predicated region
      $region25: #{tpu_custom_call.1} parent=5 // pred_check
        _
      $region26: #{tpu_custom_call.1} parent=5 // pred_check_branch
        %142 = sbr.rel (%p139) target = $region28
      $region27: #{tpu_custom_call.1} parent=5 // pred_region
        %s143 = ssub.s32 %s11, 1
        %p144 = scmp.lt.s32.totalorder %s21, 1
        %s145 = scalar_select %p144, %s21, 1
        %s146 = smul.addr %s145, 48
        %s147 = smul.addr %s146, 8
        %s148 = scalar_lea.vmem %s0, %s147
        %p149 = pneg %p49
        %p150 = pneg %p46
        %p151 = scmp.lt.s32.totalorder %s20, 0
        %s152 = scalar_select %p151, %s20, 0
        %s153 = smul.addr %s152, 4
        %s154 = scalar_lea.vmem %s1, %s153
        %p155 = pneg %p75
        %p156 = pneg %p72
        %p157 = pneg %p103
        %p158 = pneg %p100
        %s159 = sand.u32 %s90, 1
        %s160 = scalar_lea.sflag [#allocation3], %s159
        %s161 = sand.u32 %s90, 1
        %s162 = smul.addr %s161, 56
        %s163 = scalar_lea.vmem [#allocation2], %s162
        %p164 = scmp.lt.s32.totalorder %s21, 1
        %s165 = scalar_select %p164, %s21, 1
        %s166 = smul.addr %s165, 48
        %s167 = smul.addr %s166, 8
        %s168 = scalar_lea.vmem %s0, %s167
        %p169 = scmp.lt.s32.totalorder %s20, 0
        %s170 = scalar_select %p169, %s20, 0
        %s171 = smul.addr %s170, 4
        %s172 = scalar_lea.vmem %s1, %s171
        %s173 = smul.u32 7, %s21
        %v174 = vld [vmem:[%s168] ss:$2 sm:$0xff]
        %s175 = scalar_lea.vmem %s168, 48
        %v176 = vld [vmem:[%s175] ss:$2 sm:$0xff]
        %s177 = scalar_lea.vmem %s168, 96
        %v178 = vld [vmem:[%s177] ss:$2 sm:$0xff]
        %s179 = scalar_lea.vmem %s168, 144
        %v180 = vld [vmem:[%s179] ss:$2 sm:$0xff]
        %s181 = scalar_lea.vmem %s168, 192
        %v182 = vld [vmem:[%s181] ss:$2 sm:$0xff]
        %s183 = scalar_lea.vmem %s168, 240
        %v184 = vld [vmem:[%s183] ss:$2 sm:$0xff]
        %s185 = scalar_lea.vmem %s168, 288
        %v186 = vld [vmem:[%s185] ss:$2 sm:$0xff]
        %v187 = vld [vmem:[%s172] sm:$0xf]
        %s188 = scalar_lea.vmem %s168, 1
        %v189 = vld [vmem:[%s188] ss:$2 sm:$0xff]
        %s190 = scalar_lea.vmem %s168, 49
        %v191 = vld [vmem:[%s190] ss:$2 sm:$0xff]
        %s192 = scalar_lea.vmem %s168, 97
        %v193 = vld [vmem:[%s192] ss:$2 sm:$0xff]
        %s194 = scalar_lea.vmem %s168, 145
        %v195 = vld [vmem:[%s194] ss:$2 sm:$0xff]
        %s196 = scalar_lea.vmem %s168, 193
        %v197 = vld [vmem:[%s196] ss:$2 sm:$0xff]
        %s198 = scalar_lea.vmem %s168, 241
        %v199 = vld [vmem:[%s198] ss:$2 sm:$0xff]
        %s200 = scalar_lea.vmem %s168, 289
        %v201 = vld [vmem:[%s200] ss:$2 sm:$0xff]
        %s202 = scalar_lea.vmem %s172, 4
        %v203 = vld [vmem:[%s202] sm:$0xf]
        %vm204 = vcmask 31744
        %v206 = vsel %vm204, %v189, 0
        %v209 = vsel %vm204, %v191, 0
        %v212 = vsel %vm204, %v193, 0
        %v215 = vsel %vm204, %v195, 0
        %v218 = vsel %vm204, %v197, 0
        %v221 = vsel %vm204, %v199, 0
        %v224 = vsel %vm204, %v201, 0
        %vm226 = vcmask 1043456
        %v228 = vsel %vm226, %v203, 0
        %230 = vmatprep.subr.mxu0 0.0
        %231 = vmatpush1.msra.mxu0 %v228
        %232 = vmatprep.subr.mxu0 0.0
        %233 = vmatpush1.msra.mxu0 0.0
        %234 = vmatprep.subr.mxu0 0.0
        %235 = vmatpush1.msra.mxu0 0.0
        %236 = vmatprep.subr.mxu0 0.0
        %237 = vmatpush1.msra.mxu0 0.0
        %238 = vmatprep.subr.mxu0 0.0
        %239 = vmatpush1.msra.mxu0 0.0
        %240 = vmatprep.subr.mxu0 0.0
        %241 = vmatpush1.msra.mxu0 0.0
        %242 = vmatprep.subr.mxu0 0.0
        %243 = vmatpush1.msra.mxu0 0.0
        %244 = vmatprep.subr.mxu0 0.0
        %245 = vmatpush1.msra.mxu0 0.0
        %246 = vmatprep.subr.mxu0 0.0
        %247 = vmatpush1.msra.mxu0 0.0
        %248 = vmatprep.subr.mxu0 0.0
        %249 = vmatpush1.msra.mxu0 0.0
        %250 = vmatprep.subr.mxu0 0.0
        %251 = vmatpush1.msra.mxu0 0.0
        %252 = vmatprep.subr.mxu0 0.0
        %253 = vmatpush1.msra.mxu0 0.0
        %254 = vmatprep.subr.mxu0 0.0
        %255 = vmatpush1.msra.mxu0 0.0
        %256 = vmatprep.subr.mxu0 0.0
        %257 = vmatpush1.msra.mxu0 0.0
        %258 = vmatprep.subr.mxu0 0.0
        %259 = vmatpush1.msra.mxu0 0.0
        %260 = vmatprep.subr.mxu0 0.0
        %261 = vmatpush1.msra.mxu0 0.0
        %262 = vmatprep.subr.mxu0 0.0
        %263 = vmatpush1.msra.mxu0 0.0
        %264 = vmatprep.subr.mxu0 0.0
        %265 = vmatpush1.msra.mxu0 0.0
        %266 = vmatprep.subr.mxu0 0.0
        %267 = vmatpush1.msra.mxu0 0.0
        %268 = vmatprep.subr.mxu0 0.0
        %269 = vmatpush1.msra.mxu0 0.0
        %270 = vmatprep.subr.mxu0 0.0
        %271 = vmatpush1.msra.mxu0 0.0
        %272 = vmatprep.subr.mxu0 0.0
        %273 = vmatpush1.msra.mxu0 0.0
        %274 = vmatprep.subr.mxu0 0.0
        %275 = vmatpush1.msra.mxu0 0.0
        %276 = vmatprep.subr.mxu0 0.0
        %277 = vmatpush1.msra.mxu0 0.0
        %278 = vmatprep.subr.mxu0 0.0
        %279 = vmatpush1.msra.mxu0 0.0
        %280 = vmatprep.subr.mxu0 0.0
        %281 = vmatpush1.msra.mxu0 0.0
        %282 = vmatprep.subr.mxu0 0.0
        %283 = vmatpush1.msra.mxu0 0.0
        %284 = vmatprep.subr.mxu0 0.0
        %285 = vmatpush1.msra.mxu0 0.0
        %286 = vmatprep.subr.mxu0 0.0
        %287 = vmatpush1.msra.mxu0 0.0
        %288 = vmatprep.subr.mxu0 0.0
        %289 = vmatpush1.msra.mxu0 0.0
        %290 = vmatprep.subr.mxu0 0.0
        %291 = vmatpush1.msra.mxu0 0.0
        %292 = vmatprep.subr.mxu0 0.0
        %293 = vmatpush1.msra.mxu0 0.0
        %294 = vmatprep.mubr.f32.mxu0 0.0
        %295 = vmatmul.mubr.f32.gmra.mrb[0].mxu0 %v206
        %v296 = vpop.f32.mrb[0].mxu0
        %v297 = vadd.f32 0.0, %v296
        %v298 = vpop.f32.mrb[0].mxu0
        %299 = vmatprep.mubr.f32.mxu0 0.0
        %300 = vmatmul.mubr.f32.gmra.mrb[0].mxu0 %v209
        %v301 = vpop.f32.mrb[0].mxu0
        %v302 = vadd.f32 0.0, %v301
        %v303 = vpop.f32.mrb[0].mxu0
        %304 = vmatprep.mubr.f32.mxu0 0.0
        %305 = vmatmul.mubr.f32.gmra.mrb[0].mxu0 %v212
        %v306 = vpop.f32.mrb[0].mxu0
        %v307 = vadd.f32 0.0, %v306
        %v308 = vpop.f32.mrb[0].mxu0
        %309 = vmatprep.mubr.f32.mxu0 0.0
        %310 = vmatmul.mubr.f32.gmra.mrb[0].mxu0 %v215
        %v311 = vpop.f32.mrb[0].mxu0
        %v312 = vadd.f32 0.0, %v311
        %v313 = vpop.f32.mrb[0].mxu0
        %314 = vmatprep.mubr.f32.mxu0 0.0
        %315 = vmatmul.mubr.f32.gmra.mrb[0].mxu0 %v218
        %v316 = vpop.f32.mrb[0].mxu0
        %v317 = vadd.f32 0.0, %v316
        %v318 = vpop.f32.mrb[0].mxu0
        %319 = vmatprep.mubr.f32.mxu0 0.0
        %320 = vmatmul.mubr.f32.gmra.mrb[0].mxu0 %v221
        %v321 = vpop.f32.mrb[0].mxu0
        %v322 = vadd.f32 0.0, %v321
        %v323 = vpop.f32.mrb[0].mxu0
        %324 = vmatprep.mubr.f32.mxu0 0.0
        %325 = vmatmul.mubr.f32.gmra.mrb[0].mxu0 %v224
        %v326 = vpop.f32.mrb[0].mxu0
        %v327 = vadd.f32 0.0, %v326
        %v328 = vpop.f32.mrb[0].mxu0
        %329 = vdwg.mxu0
        %v331 = vsel %vm204, %v174, 0
        %v334 = vsel %vm204, %v176, 0
        %v337 = vsel %vm204, %v178, 0
        %v340 = vsel %vm204, %v180, 0
        %v343 = vsel %vm204, %v182, 0
        %v346 = vsel %vm204, %v184, 0
        %v349 = vsel %vm204, %v186, 0
        %v352 = vsel %vm226, %v187, 0
        %354 = vmatprep.subr.mxu0 0.0
        %355 = vmatpush1.msra.mxu0 %v352
        %356 = vmatprep.subr.mxu0 0.0
        %357 = vmatpush1.msra.mxu0 0.0
        %358 = vmatprep.subr.mxu0 0.0
        %359 = vmatpush1.msra.mxu0 0.0
        %360 = vmatprep.subr.mxu0 0.0
        %361 = vmatpush1.msra.mxu0 0.0
        %362 = vmatprep.subr.mxu0 0.0
        %363 = vmatpush1.msra.mxu0 0.0
        %364 = vmatprep.subr.mxu0 0.0
        %365 = vmatpush1.msra.mxu0 0.0
        %366 = vmatprep.subr.mxu0 0.0
        %367 = vmatpush1.msra.mxu0 0.0
        %368 = vmatprep.subr.mxu0 0.0
        %369 = vmatpush1.msra.mxu0 0.0
        %370 = vmatprep.subr.mxu0 0.0
        %371 = vmatpush1.msra.mxu0 0.0
        %372 = vmatprep.subr.mxu0 0.0
        %373 = vmatpush1.msra.mxu0 0.0
        %374 = vmatprep.subr.mxu0 0.0
        %375 = vmatpush1.msra.mxu0 0.0
        %376 = vmatprep.subr.mxu0 0.0
        %377 = vmatpush1.msra.mxu0 0.0
        %378 = vmatprep.subr.mxu0 0.0
        %379 = vmatpush1.msra.mxu0 0.0
        %380 = vmatprep.subr.mxu0 0.0
        %381 = vmatpush1.msra.mxu0 0.0
        %382 = vmatprep.subr.mxu0 0.0
        %383 = vmatpush1.msra.mxu0 0.0
        %384 = vmatprep.subr.mxu0 0.0
        %385 = vmatpush1.msra.mxu0 0.0
        %386 = vmatprep.subr.mxu0 0.0
        %387 = vmatpush1.msra.mxu0 0.0
        %388 = vmatprep.subr.mxu0 0.0
        %389 = vmatpush1.msra.mxu0 0.0
        %390 = vmatprep.subr.mxu0 0.0
        %391 = vmatpush1.msra.mxu0 0.0
        %392 = vmatprep.subr.mxu0 0.0
        %393 = vmatpush1.msra.mxu0 0.0
        %394 = vmatprep.subr.mxu0 0.0
        %395 = vmatpush1.msra.mxu0 0.0
        %396 = vmatprep.subr.mxu0 0.0
        %397 = vmatpush1.msra.mxu0 0.0
        %398 = vmatprep.subr.mxu0 0.0
        %399 = vmatpush1.msra.mxu0 0.0
        %400 = vmatprep.subr.mxu0 0.0
        %401 = vmatpush1.msra.mxu0 0.0
        %402 = vmatprep.subr.mxu0 0.0
        %403 = vmatpush1.msra.mxu0 0.0
        %404 = vmatprep.subr.mxu0 0.0
        %405 = vmatpush1.msra.mxu0 0.0
        %406 = vmatprep.subr.mxu0 0.0
        %407 = vmatpush1.msra.mxu0 0.0
        %408 = vmatprep.subr.mxu0 0.0
        %409 = vmatpush1.msra.mxu0 0.0
        %410 = vmatprep.subr.mxu0 0.0
        %411 = vmatpush1.msra.mxu0 0.0
        %412 = vmatprep.subr.mxu0 0.0
        %413 = vmatpush1.msra.mxu0 0.0
        %414 = vmatprep.subr.mxu0 0.0
        %415 = vmatpush1.msra.mxu0 0.0
        %416 = vmatprep.subr.mxu0 0.0
        %417 = vmatpush1.msra.mxu0 0.0
        %418 = vmatprep.mubr.f32.mxu0 0.0
        %419 = vmatmul.mubr.f32.gmra.mrb[0].mxu0 %v331
        %v420 = vpop.f32.mrb[0].mxu0
        %v421 = vadd.f32 %v297, %v420
        %v422 = vpop.f32.mrb[0].mxu0
        %423 = vmatprep.mubr.f32.mxu0 0.0
        %424 = vmatmul.mubr.f32.gmra.mrb[0].mxu0 %v334
        %v425 = vpop.f32.mrb[0].mxu0
        %v426 = vadd.f32 %v302, %v425
        %v427 = vpop.f32.mrb[0].mxu0
        %428 = vmatprep.mubr.f32.mxu0 0.0
        %429 = vmatmul.mubr.f32.gmra.mrb[0].mxu0 %v337
        %v430 = vpop.f32.mrb[0].mxu0
        %v431 = vadd.f32 %v307, %v430
        %v432 = vpop.f32.mrb[0].mxu0
        %433 = vmatprep.mubr.f32.mxu0 0.0
        %434 = vmatmul.mubr.f32.gmra.mrb[0].mxu0 %v340
        %v435 = vpop.f32.mrb[0].mxu0
        %v436 = vadd.f32 %v312, %v435
        %v437 = vpop.f32.mrb[0].mxu0
        %438 = vmatprep.mubr.f32.mxu0 0.0
        %439 = vmatmul.mubr.f32.gmra.mrb[0].mxu0 %v343
        %v440 = vpop.f32.mrb[0].mxu0
        %v441 = vadd.f32 %v317, %v440
        %v442 = vpop.f32.mrb[0].mxu0
        %443 = vmatprep.mubr.f32.mxu0 0.0
        %444 = vmatmul.mubr.f32.gmra.mrb[0].mxu0 %v346
        %v445 = vpop.f32.mrb[0].mxu0
        %v446 = vadd.f32 %v322, %v445
        %v447 = vpop.f32.mrb[0].mxu0
        %448 = vmatprep.mubr.f32.mxu0 0.0
        %449 = vmatmul.mubr.f32.gmra.mrb[0].mxu0 %v349
        %v450 = vpop.f32.mrb[0].mxu0
        %v451 = vadd.f32 %v327, %v450
        %v452 = vpop.f32.mrb[0].mxu0
        %453 = vdwg.mxu0
        %s454 = scalar_lea.vmem %s168, 2
        %v455 = vld [vmem:[%s454] ss:$2 sm:$0xff]
        %s456 = scalar_lea.vmem %s168, 50
        %v457 = vld [vmem:[%s456] ss:$2 sm:$0xff]
        %s458 = scalar_lea.vmem %s168, 98
        %v459 = vld [vmem:[%s458] ss:$2 sm:$0xff]
        %s460 = scalar_lea.vmem %s168, 146
        %v461 = vld [vmem:[%s460] ss:$2 sm:$0xff]
        %s462 = scalar_lea.vmem %s168, 194
        %v463 = vld [vmem:[%s462] ss:$2 sm:$0xff]
        %s464 = scalar_lea.vmem %s168, 242
        %v465 = vld [vmem:[%s464] ss:$2 sm:$0xff]
        %s466 = scalar_lea.vmem %s168, 290
        %v467 = vld [vmem:[%s466] ss:$2 sm:$0xff]
        %s468 = scalar_lea.vmem %s172, 8
        %v469 = vld [vmem:[%s468] sm:$0xf]
        %v471 = vsel %vm204, %v455, 0
        %v474 = vsel %vm204, %v457, 0
        %v477 = vsel %vm204, %v459, 0
        %v480 = vsel %vm204, %v461, 0
        %v483 = vsel %vm204, %v463, 0
        %v486 = vsel %vm204, %v465, 0
        %v489 = vsel %vm204, %v467, 0
        %v492 = vsel %vm226, %v469, 0
        %494 = vmatprep.subr.mxu0 0.0
        %495 = vmatpush1.msra.mxu0 %v492
        %496 = vmatprep.subr.mxu0 0.0
        %497 = vmatpush1.msra.mxu0 0.0
        %498 = vmatprep.subr.mxu0 0.0
        %499 = vmatpush1.msra.mxu0 0.0
        %500 = vmatprep.subr.mxu0 0.0
        %501 = vmatpush1.msra.mxu0 0.0
        %502 = vmatprep.subr.mxu0 0.0
        %503 = vmatpush1.msra.mxu0 0.0
        %504 = vmatprep.subr.mxu0 0.0
        %505 = vmatpush1.msra.mxu0 0.0
        %506 = vmatprep.subr.mxu0 0.0
        %507 = vmatpush1.msra.mxu0 0.0
        %508 = vmatprep.subr.mxu0 0.0
        %509 = vmatpush1.msra.mxu0 0.0
        %510 = vmatprep.subr.mxu0 0.0
        %511 = vmatpush1.msra.mxu0 0.0
        %512 = vmatprep.subr.mxu0 0.0
        %513 = vmatpush1.msra.mxu0 0.0
        %514 = vmatprep.subr.mxu0 0.0
        %515 = vmatpush1.msra.mxu0 0.0
        %516 = vmatprep.subr.mxu0 0.0
        %517 = vmatpush1.msra.mxu0 0.0
        %518 = vmatprep.subr.mxu0 0.0
        %519 = vmatpush1.msra.mxu0 0.0
        %520 = vmatprep.subr.mxu0 0.0
        %521 = vmatpush1.msra.mxu0 0.0
        %522 = vmatprep.subr.mxu0 0.0
        %523 = vmatpush1.msra.mxu0 0.0
        %524 = vmatprep.subr.mxu0 0.0
        %525 = vmatpush1.msra.mxu0 0.0
        %526 = vmatprep.subr.mxu0 0.0
        %527 = vmatpush1.msra.mxu0 0.0
        %528 = vmatprep.subr.mxu0 0.0
        %529 = vmatpush1.msra.mxu0 0.0
        %530 = vmatprep.subr.mxu0 0.0
        %531 = vmatpush1.msra.mxu0 0.0
        %532 = vmatprep.subr.mxu0 0.0
        %533 = vmatpush1.msra.mxu0 0.0
        %534 = vmatprep.subr.mxu0 0.0
        %535 = vmatpush1.msra.mxu0 0.0
        %536 = vmatprep.subr.mxu0 0.0
        %537 = vmatpush1.msra.mxu0 0.0
        %538 = vmatprep.subr.mxu0 0.0
        %539 = vmatpush1.msra.mxu0 0.0
        %540 = vmatprep.subr.mxu0 0.0
        %541 = vmatpush1.msra.mxu0 0.0
        %542 = vmatprep.subr.mxu0 0.0
        %543 = vmatpush1.msra.mxu0 0.0
        %544 = vmatprep.subr.mxu0 0.0
        %545 = vmatpush1.msra.mxu0 0.0
        %546 = vmatprep.subr.mxu0 0.0
        %547 = vmatpush1.msra.mxu0 0.0
        %548 = vmatprep.subr.mxu0 0.0
        %549 = vmatpush1.msra.mxu0 0.0
        %550 = vmatprep.subr.mxu0 0.0
        %551 = vmatpush1.msra.mxu0 0.0
        %552 = vmatprep.subr.mxu0 0.0
        %553 = vmatpush1.msra.mxu0 0.0
        %554 = vmatprep.subr.mxu0 0.0
        %555 = vmatpush1.msra.mxu0 0.0
        %556 = vmatprep.subr.mxu0 0.0
        %557 = vmatpush1.msra.mxu0 0.0
        %558 = vmatprep.mubr.f32.mxu0 0.0
        %559 = vmatmul.mubr.f32.gmra.mrb[0].mxu0 %v471
        %v560 = vpop.f32.mrb[0].mxu0
        %v561 = vadd.f32 0.0, %v560
        %v562 = vpop.f32.mrb[0].mxu0
        %563 = vmatprep.mubr.f32.mxu0 0.0
        %564 = vmatmul.mubr.f32.gmra.mrb[0].mxu0 %v474
        %v565 = vpop.f32.mrb[0].mxu0
        %v566 = vadd.f32 0.0, %v565
        %v567 = vpop.f32.mrb[0].mxu0
        %568 = vmatprep.mubr.f32.mxu0 0.0
        %569 = vmatmul.mubr.f32.gmra.mrb[0].mxu0 %v477
        %v570 = vpop.f32.mrb[0].mxu0
        %v571 = vadd.f32 0.0, %v570
        %v572 = vpop.f32.mrb[0].mxu0
        %573 = vmatprep.mubr.f32.mxu0 0.0
        %574 = vmatmul.mubr.f32.gmra.mrb[0].mxu0 %v480
        %v575 = vpop.f32.mrb[0].mxu0
        %v576 = vadd.f32 0.0, %v575
        %v577 = vpop.f32.mrb[0].mxu0
        %578 = vmatprep.mubr.f32.mxu0 0.0
        %579 = vmatmul.mubr.f32.gmra.mrb[0].mxu0 %v483
        %v580 = vpop.f32.mrb[0].mxu0
        %v581 = vadd.f32 0.0, %v580
        %v582 = vpop.f32.mrb[0].mxu0
        %583 = vmatprep.mubr.f32.mxu0 0.0
        %584 = vmatmul.mubr.f32.gmra.mrb[0].mxu0 %v486
        %v585 = vpop.f32.mrb[0].mxu0
        %v586 = vadd.f32 0.0, %v585
        %v587 = vpop.f32.mrb[0].mxu0
        %588 = vmatprep.mubr.f32.mxu0 0.0
        %589 = vmatmul.mubr.f32.gmra.mrb[0].mxu0 %v489
        %v590 = vpop.f32.mrb[0].mxu0
        %v591 = vadd.f32 0.0, %v590
        %v592 = vpop.f32.mrb[0].mxu0
        %593 = vdwg.mxu0
        %v594 = vadd.f32 %v421, %v561
        %v595 = vadd.f32 %v426, %v566
        %v596 = vadd.f32 %v431, %v571
        %v597 = vadd.f32 %v436, %v576
        %v598 = vadd.f32 %v441, %v581
        %v599 = vadd.f32 %v446, %v586
        %v600 = vadd.f32 %v451, %v591
        %s601 = scalar_lea.vmem %s168, 24
        %v602 = vld [vmem:[%s601] ss:$2 sm:$0xff]
        %s603 = scalar_lea.vmem %s601, 48
        %v604 = vld [vmem:[%s603] ss:$2 sm:$0xff]
        %s605 = scalar_lea.vmem %s601, 96
        %v606 = vld [vmem:[%s605] ss:$2 sm:$0xff]
        %s607 = scalar_lea.vmem %s601, 144
        %v608 = vld [vmem:[%s607] ss:$2 sm:$0xff]
        %s609 = scalar_lea.vmem %s601, 192
        %v610 = vld [vmem:[%s609] ss:$2 sm:$0xff]
        %s611 = scalar_lea.vmem %s601, 240
        %v612 = vld [vmem:[%s611] ss:$2 sm:$0xff]
        %s613 = scalar_lea.vmem %s601, 288
        %v614 = vld [vmem:[%s613] ss:$2 sm:$0xff]
        %s615 = scalar_lea.vmem %s172, 12
        %v616 = vld [vmem:[%s615] sm:$0xf]
        %v618 = vsel %vm204, %v602, 0
        %v621 = vsel %vm204, %v604, 0
        %v624 = vsel %vm204, %v606, 0
        %v627 = vsel %vm204, %v608, 0
        %v630 = vsel %vm204, %v610, 0
        %v633 = vsel %vm204, %v612, 0
        %v636 = vsel %vm204, %v614, 0
        %v639 = vsel %vm226, %v616, 0
        %641 = vmatprep.subr.mxu0 0.0
        %642 = vmatpush1.msra.mxu0 %v639
        %643 = vmatprep.subr.mxu0 0.0
        %644 = vmatpush1.msra.mxu0 0.0
        %645 = vmatprep.subr.mxu0 0.0
        %646 = vmatpush1.msra.mxu0 0.0
        %647 = vmatprep.subr.mxu0 0.0
        %648 = vmatpush1.msra.mxu0 0.0
        %649 = vmatprep.subr.mxu0 0.0
        %650 = vmatpush1.msra.mxu0 0.0
        %651 = vmatprep.subr.mxu0 0.0
        %652 = vmatpush1.msra.mxu0 0.0
        %653 = vmatprep.subr.mxu0 0.0
        %654 = vmatpush1.msra.mxu0 0.0
        %655 = vmatprep.subr.mxu0 0.0
        %656 = vmatpush1.msra.mxu0 0.0
        %657 = vmatprep.subr.mxu0 0.0
        %658 = vmatpush1.msra.mxu0 0.0
        %659 = vmatprep.subr.mxu0 0.0
        %660 = vmatpush1.msra.mxu0 0.0
        %661 = vmatprep.subr.mxu0 0.0
        %662 = vmatpush1.msra.mxu0 0.0
        %663 = vmatprep.subr.mxu0 0.0
        %664 = vmatpush1.msra.mxu0 0.0
        %665 = vmatprep.subr.mxu0 0.0
        %666 = vmatpush1.msra.mxu0 0.0
        %667 = vmatprep.subr.mxu0 0.0
        %668 = vmatpush1.msra.mxu0 0.0
        %669 = vmatprep.subr.mxu0 0.0
        %670 = vmatpush1.msra.mxu0 0.0
        %671 = vmatprep.subr.mxu0 0.0
        %672 = vmatpush1.msra.mxu0 0.0
        %673 = vmatprep.subr.mxu0 0.0
        %674 = vmatpush1.msra.mxu0 0.0
        %675 = vmatprep.subr.mxu0 0.0
        %676 = vmatpush1.msra.mxu0 0.0
        %677 = vmatprep.subr.mxu0 0.0
        %678 = vmatpush1.msra.mxu0 0.0
        %679 = vmatprep.subr.mxu0 0.0
        %680 = vmatpush1.msra.mxu0 0.0
        %681 = vmatprep.subr.mxu0 0.0
        %682 = vmatpush1.msra.mxu0 0.0
        %683 = vmatprep.subr.mxu0 0.0
        %684 = vmatpush1.msra.mxu0 0.0
        %685 = vmatprep.subr.mxu0 0.0
        %686 = vmatpush1.msra.mxu0 0.0
        %687 = vmatprep.subr.mxu0 0.0
        %688 = vmatpush1.msra.mxu0 0.0
        %689 = vmatprep.subr.mxu0 0.0
        %690 = vmatpush1.msra.mxu0 0.0
        %691 = vmatprep.subr.mxu0 0.0
        %692 = vmatpush1.msra.mxu0 0.0
        %693 = vmatprep.subr.mxu0 0.0
        %694 = vmatpush1.msra.mxu0 0.0
        %695 = vmatprep.subr.mxu0 0.0
        %696 = vmatpush1.msra.mxu0 0.0
        %697 = vmatprep.subr.mxu0 0.0
        %698 = vmatpush1.msra.mxu0 0.0
        %699 = vmatprep.subr.mxu0 0.0
        %700 = vmatpush1.msra.mxu0 0.0
        %701 = vmatprep.subr.mxu0 0.0
        %702 = vmatpush1.msra.mxu0 0.0
        %703 = vmatprep.subr.mxu0 0.0
        %704 = vmatpush1.msra.mxu0 0.0
        %705 = vmatprep.mubr.f32.mxu0 0.0
        %706 = vmatmul.mubr.f32.gmra.mrb[0].mxu0 %v618
        %v707 = vpop.f32.mrb[0].mxu0
        %v708 = vadd.f32 0.0, %v707
        %v709 = vpop.f32.mrb[0].mxu0
        %710 = vmatprep.mubr.f32.mxu0 0.0
        %711 = vmatmul.mubr.f32.gmra.mrb[0].mxu0 %v621
        %v712 = vpop.f32.mrb[0].mxu0
        %v713 = vadd.f32 0.0, %v712
        %v714 = vpop.f32.mrb[0].mxu0
        %715 = vmatprep.mubr.f32.mxu0 0.0
        %716 = vmatmul.mubr.f32.gmra.mrb[0].mxu0 %v624
        %v717 = vpop.f32.mrb[0].mxu0
        %v718 = vadd.f32 0.0, %v717
        %v719 = vpop.f32.mrb[0].mxu0
        %720 = vmatprep.mubr.f32.mxu0 0.0
        %721 = vmatmul.mubr.f32.gmra.mrb[0].mxu0 %v627
        %v722 = vpop.f32.mrb[0].mxu0
        %v723 = vadd.f32 0.0, %v722
        %v724 = vpop.f32.mrb[0].mxu0
        %725 = vmatprep.mubr.f32.mxu0 0.0
        %726 = vmatmul.mubr.f32.gmra.mrb[0].mxu0 %v630
        %v727 = vpop.f32.mrb[0].mxu0
        %v728 = vadd.f32 0.0, %v727
        %v729 = vpop.f32.mrb[0].mxu0
        %730 = vmatprep.mubr.f32.mxu0 0.0
        %731 = vmatmul.mubr.f32.gmra.mrb[0].mxu0 %v633
        %v732 = vpop.f32.mrb[0].mxu0
        %v733 = vadd.f32 0.0, %v732
        %v734 = vpop.f32.mrb[0].mxu0
        %735 = vmatprep.mubr.f32.mxu0 0.0
        %736 = vmatmul.mubr.f32.gmra.mrb[0].mxu0 %v636
        %v737 = vpop.f32.mrb[0].mxu0
        %v738 = vadd.f32 0.0, %v737
        %v739 = vpop.f32.mrb[0].mxu0
        %740 = vdwg.mxu0
        %v741 = vadd.f32 %v594, %v708
        %v742 = vadd.f32 %v595, %v713
        %v743 = vadd.f32 %v596, %v718
        %v744 = vadd.f32 %v597, %v723
        %v745 = vadd.f32 %v598, %v728
        %v746 = vadd.f32 %v599, %v733
        %v747 = vadd.f32 %v600, %v738
        %s748 = scalar_lea.vmem %s601, 1
        %v749 = vld [vmem:[%s748] ss:$2 sm:$0xff]
        %s750 = scalar_lea.vmem %s601, 49
        %v751 = vld [vmem:[%s750] ss:$2 sm:$0xff]
        %s752 = scalar_lea.vmem %s601, 97
        %v753 = vld [vmem:[%s752] ss:$2 sm:$0xff]
        %s754 = scalar_lea.vmem %s601, 145
        %v755 = vld [vmem:[%s754] ss:$2 sm:$0xff]
        %s756 = scalar_lea.vmem %s601, 193
        %v757 = vld [vmem:[%s756] ss:$2 sm:$0xff]
        %s758 = scalar_lea.vmem %s601, 241
        %v759 = vld [vmem:[%s758] ss:$2 sm:$0xff]
        %s760 = scalar_lea.vmem %s601, 289
        %v761 = vld [vmem:[%s760] ss:$2 sm:$0xff]
        %s762 = scalar_lea.vmem %s172, 16
        %v763 = vld [vmem:[%s762] sm:$0xf]
        %v765 = vsel %vm204, %v749, 0
        %v768 = vsel %vm204, %v751, 0
        %v771 = vsel %vm204, %v753, 0
        %v774 = vsel %vm204, %v755, 0
        %v777 = vsel %vm204, %v757, 0
        %v780 = vsel %vm204, %v759, 0
        %v783 = vsel %vm204, %v761, 0
        %v786 = vsel %vm226, %v763, 0
        %788 = vmatprep.subr.mxu0 0.0
        %789 = vmatpush1.msra.mxu0 %v786
        %790 = vmatprep.subr.mxu0 0.0
        %791 = vmatpush1.msra.mxu0 0.0
        %792 = vmatprep.subr.mxu0 0.0
        %793 = vmatpush1.msra.mxu0 0.0
        %794 = vmatprep.subr.mxu0 0.0
        %795 = vmatpush1.msra.mxu0 0.0
        %796 = vmatprep.subr.mxu0 0.0
        %797 = vmatpush1.msra.mxu0 0.0
        %798 = vmatprep.subr.mxu0 0.0
        %799 = vmatpush1.msra.mxu0 0.0
        %800 = vmatprep.subr.mxu0 0.0
        %801 = vmatpush1.msra.mxu0 0.0
        %802 = vmatprep.subr.mxu0 0.0
        %803 = vmatpush1.msra.mxu0 0.0
        %804 = vmatprep.subr.mxu0 0.0
        %805 = vmatpush1.msra.mxu0 0.0
        %806 = vmatprep.subr.mxu0 0.0
        %807 = vmatpush1.msra.mxu0 0.0
        %808 = vmatprep.subr.mxu0 0.0
        %809 = vmatpush1.msra.mxu0 0.0
        %810 = vmatprep.subr.mxu0 0.0
        %811 = vmatpush1.msra.mxu0 0.0
        %812 = vmatprep.subr.mxu0 0.0
        %813 = vmatpush1.msra.mxu0 0.0
        %814 = vmatprep.subr.mxu0 0.0
        %815 = vmatpush1.msra.mxu0 0.0
        %816 = vmatprep.subr.mxu0 0.0
        %817 = vmatpush1.msra.mxu0 0.0
        %818 = vmatprep.subr.mxu0 0.0
        %819 = vmatpush1.msra.mxu0 0.0
        %820 = vmatprep.subr.mxu0 0.0
        %821 = vmatpush1.msra.mxu0 0.0
        %822 = vmatprep.subr.mxu0 0.0
        %823 = vmatpush1.msra.mxu0 0.0
        %824 = vmatprep.subr.mxu0 0.0
        %825 = vmatpush1.msra.mxu0 0.0
        %826 = vmatprep.subr.mxu0 0.0
        %827 = vmatpush1.msra.mxu0 0.0
        %828 = vmatprep.subr.mxu0 0.0
        %829 = vmatpush1.msra.mxu0 0.0
        %830 = vmatprep.subr.mxu0 0.0
        %831 = vmatpush1.msra.mxu0 0.0
        %832 = vmatprep.subr.mxu0 0.0
        %833 = vmatpush1.msra.mxu0 0.0
        %834 = vmatprep.subr.mxu0 0.0
        %835 = vmatpush1.msra.mxu0 0.0
        %836 = vmatprep.subr.mxu0 0.0
        %837 = vmatpush1.msra.mxu0 0.0
        %838 = vmatprep.subr.mxu0 0.0
        %839 = vmatpush1.msra.mxu0 0.0
        %840 = vmatprep.subr.mxu0 0.0
        %841 = vmatpush1.msra.mxu0 0.0
        %842 = vmatprep.subr.mxu0 0.0
        %843 = vmatpush1.msra.mxu0 0.0
        %844 = vmatprep.subr.mxu0 0.0
        %845 = vmatpush1.msra.mxu0 0.0
        %846 = vmatprep.subr.mxu0 0.0
        %847 = vmatpush1.msra.mxu0 0.0
        %848 = vmatprep.subr.mxu0 0.0
        %849 = vmatpush1.msra.mxu0 0.0
        %850 = vmatprep.subr.mxu0 0.0
        %851 = vmatpush1.msra.mxu0 0.0
        %852 = vmatprep.mubr.f32.mxu0 0.0
        %853 = vmatmul.mubr.f32.gmra.mrb[0].mxu0 %v765
        %v854 = vpop.f32.mrb[0].mxu0
        %v855 = vadd.f32 0.0, %v854
        %v856 = vpop.f32.mrb[0].mxu0
        %857 = vmatprep.mubr.f32.mxu0 0.0
        %858 = vmatmul.mubr.f32.gmra.mrb[0].mxu0 %v768
        %v859 = vpop.f32.mrb[0].mxu0
        %v860 = vadd.f32 0.0, %v859
        %v861 = vpop.f32.mrb[0].mxu0
        %862 = vmatprep.mubr.f32.mxu0 0.0
        %863 = vmatmul.mubr.f32.gmra.mrb[0].mxu0 %v771
        %v864 = vpop.f32.mrb[0].mxu0
        %v865 = vadd.f32 0.0, %v864
        %v866 = vpop.f32.mrb[0].mxu0
        %867 = vmatprep.mubr.f32.mxu0 0.0
        %868 = vmatmul.mubr.f32.gmra.mrb[0].mxu0 %v774
        %v869 = vpop.f32.mrb[0].mxu0
        %v870 = vadd.f32 0.0, %v869
        %v871 = vpop.f32.mrb[0].mxu0
        %872 = vmatprep.mubr.f32.mxu0 0.0
        %873 = vmatmul.mubr.f32.gmra.mrb[0].mxu0 %v777
        %v874 = vpop.f32.mrb[0].mxu0
        %v875 = vadd.f32 0.0, %v874
        %v876 = vpop.f32.mrb[0].mxu0
        %877 = vmatprep.mubr.f32.mxu0 0.0
        %878 = vmatmul.mubr.f32.gmra.mrb[0].mxu0 %v780
        %v879 = vpop.f32.mrb[0].mxu0
        %v880 = vadd.f32 0.0, %v879
        %v881 = vpop.f32.mrb[0].mxu0
        %882 = vmatprep.mubr.f32.mxu0 0.0
        %883 = vmatmul.mubr.f32.gmra.mrb[0].mxu0 %v783
        %v884 = vpop.f32.mrb[0].mxu0
        %v885 = vadd.f32 0.0, %v884
        %v886 = vpop.f32.mrb[0].mxu0
        %887 = vdwg.mxu0
        %v888 = vadd.f32 %v741, %v855
        %v889 = vadd.f32 %v742, %v860
        %v890 = vadd.f32 %v743, %v865
        %v891 = vadd.f32 %v744, %v870
        %v892 = vadd.f32 %v745, %v875
        %v893 = vadd.f32 %v746, %v880
        %v894 = vadd.f32 %v747, %v885
        %s895 = scalar_lea.vmem %s601, 2
        %v896 = vld [vmem:[%s895] ss:$2 sm:$0xff]
        %s897 = scalar_lea.vmem %s601, 50
        %v898 = vld [vmem:[%s897] ss:$2 sm:$0xff]
        %s899 = scalar_lea.vmem %s601, 98
        %v900 = vld [vmem:[%s899] ss:$2 sm:$0xff]
        %s901 = scalar_lea.vmem %s601, 146
        %v902 = vld [vmem:[%s901] ss:$2 sm:$0xff]
        %s903 = scalar_lea.vmem %s601, 194
        %v904 = vld [vmem:[%s903] ss:$2 sm:$0xff]
        %s905 = scalar_lea.vmem %s601, 242
        %v906 = vld [vmem:[%s905] ss:$2 sm:$0xff]
        %s907 = scalar_lea.vmem %s601, 290
        %v908 = vld [vmem:[%s907] ss:$2 sm:$0xff]
        %s909 = scalar_lea.vmem %s172, 20
        %v910 = vld [vmem:[%s909] sm:$0xf]
        %v912 = vsel %vm204, %v896, 0
        %v915 = vsel %vm204, %v898, 0
        %v918 = vsel %vm204, %v900, 0
        %v921 = vsel %vm204, %v902, 0
        %v924 = vsel %vm204, %v904, 0
        %v927 = vsel %vm204, %v906, 0
        %v930 = vsel %vm204, %v908, 0
        %v933 = vsel %vm226, %v910, 0
        %935 = vmatprep.subr.mxu0 0.0
        %936 = vmatpush1.msra.mxu0 %v933
        %937 = vmatprep.subr.mxu0 0.0
        %938 = vmatpush1.msra.mxu0 0.0
        %939 = vmatprep.subr.mxu0 0.0
        %940 = vmatpush1.msra.mxu0 0.0
        %941 = vmatprep.subr.mxu0 0.0
        %942 = vmatpush1.msra.mxu0 0.0
        %943 = vmatprep.subr.mxu0 0.0
        %944 = vmatpush1.msra.mxu0 0.0
        %945 = vmatprep.subr.mxu0 0.0
        %946 = vmatpush1.msra.mxu0 0.0
        %947 = vmatprep.subr.mxu0 0.0
        %948 = vmatpush1.msra.mxu0 0.0
        %949 = vmatprep.subr.mxu0 0.0
        %950 = vmatpush1.msra.mxu0 0.0
        %951 = vmatprep.subr.mxu0 0.0
        %952 = vmatpush1.msra.mxu0 0.0
        %953 = vmatprep.subr.mxu0 0.0
        %954 = vmatpush1.msra.mxu0 0.0
        %955 = vmatprep.subr.mxu0 0.0
        %956 = vmatpush1.msra.mxu0 0.0
        %957 = vmatprep.subr.mxu0 0.0
        %958 = vmatpush1.msra.mxu0 0.0
        %959 = vmatprep.subr.mxu0 0.0
        %960 = vmatpush1.msra.mxu0 0.0
        %961 = vmatprep.subr.mxu0 0.0
        %962 = vmatpush1.msra.mxu0 0.0
        %963 = vmatprep.subr.mxu0 0.0
        %964 = vmatpush1.msra.mxu0 0.0
        %965 = vmatprep.subr.mxu0 0.0
        %966 = vmatpush1.msra.mxu0 0.0
        %967 = vmatprep.subr.mxu0 0.0
        %968 = vmatpush1.msra.mxu0 0.0
        %969 = vmatprep.subr.mxu0 0.0
        %970 = vmatpush1.msra.mxu0 0.0
        %971 = vmatprep.subr.mxu0 0.0
        %972 = vmatpush1.msra.mxu0 0.0
        %973 = vmatprep.subr.mxu0 0.0
        %974 = vmatpush1.msra.mxu0 0.0
        %975 = vmatprep.subr.mxu0 0.0
        %976 = vmatpush1.msra.mxu0 0.0
        %977 = vmatprep.subr.mxu0 0.0
        %978 = vmatpush1.msra.mxu0 0.0
        %979 = vmatprep.subr.mxu0 0.0
        %980 = vmatpush1.msra.mxu0 0.0
        %981 = vmatprep.subr.mxu0 0.0
        %982 = vmatpush1.msra.mxu0 0.0
        %983 = vmatprep.subr.mxu0 0.0
        %984 = vmatpush1.msra.mxu0 0.0
        %985 = vmatprep.subr.mxu0 0.0
        %986 = vmatpush1.msra.mxu0 0.0
        %987 = vmatprep.subr.mxu0 0.0
        %988 = vmatpush1.msra.mxu0 0.0
        %989 = vmatprep.subr.mxu0 0.0
        %990 = vmatpush1.msra.mxu0 0.0
        %991 = vmatprep.subr.mxu0 0.0
        %992 = vmatpush1.msra.mxu0 0.0
        %993 = vmatprep.subr.mxu0 0.0
        %994 = vmatpush1.msra.mxu0 0.0
        %995 = vmatprep.subr.mxu0 0.0
        %996 = vmatpush1.msra.mxu0 0.0
        %997 = vmatprep.subr.mxu0 0.0
        %998 = vmatpush1.msra.mxu0 0.0
        %999 = vmatprep.mubr.f32.mxu0 0.0
        %1000 = vmatmul.mubr.f32.gmra.mrb[0].mxu0 %v912
        %v1001 = vpop.f32.mrb[0].mxu0
        %v1002 = vadd.f32 0.0, %v1001
        %v1003 = vpop.f32.mrb[0].mxu0
        %1004 = vmatprep.mubr.f32.mxu0 0.0
        %1005 = vmatmul.mubr.f32.gmra.mrb[0].mxu0 %v915
        %v1006 = vpop.f32.mrb[0].mxu0
        %v1007 = vadd.f32 0.0, %v1006
        %v1008 = vpop.f32.mrb[0].mxu0
        %1009 = vmatprep.mubr.f32.mxu0 0.0
        %1010 = vmatmul.mubr.f32.gmra.mrb[0].mxu0 %v918
        %v1011 = vpop.f32.mrb[0].mxu0
        %v1012 = vadd.f32 0.0, %v1011
        %v1013 = vpop.f32.mrb[0].mxu0
        %1014 = vmatprep.mubr.f32.mxu0 0.0
        %1015 = vmatmul.mubr.f32.gmra.mrb[0].mxu0 %v921
        %v1016 = vpop.f32.mrb[0].mxu0
        %v1017 = vadd.f32 0.0, %v1016
        %v1018 = vpop.f32.mrb[0].mxu0
        %1019 = vmatprep.mubr.f32.mxu0 0.0
        %1020 = vmatmul.mubr.f32.gmra.mrb[0].mxu0 %v924
        %v1021 = vpop.f32.mrb[0].mxu0
        %v1022 = vadd.f32 0.0, %v1021
        %v1023 = vpop.f32.mrb[0].mxu0
        %1024 = vmatprep.mubr.f32.mxu0 0.0
        %1025 = vmatmul.mubr.f32.gmra.mrb[0].mxu0 %v927
        %v1026 = vpop.f32.mrb[0].mxu0
        %v1027 = vadd.f32 0.0, %v1026
        %v1028 = vpop.f32.mrb[0].mxu0
        %1029 = vmatprep.mubr.f32.mxu0 0.0
        %1030 = vmatmul.mubr.f32.gmra.mrb[0].mxu0 %v930
        %v1031 = vpop.f32.mrb[0].mxu0
        %v1032 = vadd.f32 0.0, %v1031
        %v1033 = vpop.f32.mrb[0].mxu0
        %1034 = vdwg.mxu0
        %v1035 = vadd.f32 %v888, %v1002
        %v1036 = vadd.f32 %v889, %v1007
        %v1037 = vadd.f32 %v890, %v1012
        %v1038 = vadd.f32 %v891, %v1017
        %v1039 = vadd.f32 %v892, %v1022
        %v1040 = vadd.f32 %v893, %v1027
        %v1041 = vadd.f32 %v894, %v1032
        %s1042 = scalar_lea.vmem %s168, 48
        %v1043 = vld [vmem:[%s1042] ss:$2 sm:$0xff]
        %s1044 = scalar_lea.vmem %s1042, 48
        %v1045 = vld [vmem:[%s1044] ss:$2 sm:$0xff]
        %s1046 = scalar_lea.vmem %s1042, 96
        %v1047 = vld [vmem:[%s1046] ss:$2 sm:$0xff]
        %s1048 = scalar_lea.vmem %s1042, 144
        %v1049 = vld [vmem:[%s1048] ss:$2 sm:$0xff]
        %s1050 = scalar_lea.vmem %s1042, 192
        %v1051 = vld [vmem:[%s1050] ss:$2 sm:$0xff]
        %s1052 = scalar_lea.vmem %s1042, 240
        %v1053 = vld [vmem:[%s1052] ss:$2 sm:$0xff]
        %s1054 = scalar_lea.vmem %s1042, 288
        %v1055 = vld [vmem:[%s1054] ss:$2 sm:$0xff]
        %s1056 = scalar_lea.vmem %s172, 24
        %v1057 = vld [vmem:[%s1056] sm:$0xf]
        %v1059 = vsel %vm204, %v1043, 0
        %v1062 = vsel %vm204, %v1045, 0
        %v1065 = vsel %vm204, %v1047, 0
        %v1068 = vsel %vm204, %v1049, 0
        %v1071 = vsel %vm204, %v1051, 0
        %v1074 = vsel %vm204, %v1053, 0
        %v1077 = vsel %vm204, %v1055, 0
        %v1080 = vsel %vm226, %v1057, 0
        %1082 = vmatprep.subr.mxu0 0.0
        %1083 = vmatpush1.msra.mxu0 %v1080
        %1084 = vmatprep.subr.mxu0 0.0
        %1085 = vmatpush1.msra.mxu0 0.0
        %1086 = vmatprep.subr.mxu0 0.0
        %1087 = vmatpush1.msra.mxu0 0.0
        %1088 = vmatprep.subr.mxu0 0.0
        %1089 = vmatpush1.msra.mxu0 0.0
        %1090 = vmatprep.subr.mxu0 0.0
        %1091 = vmatpush1.msra.mxu0 0.0
        %1092 = vmatprep.subr.mxu0 0.0
        %1093 = vmatpush1.msra.mxu0 0.0
        %1094 = vmatprep.subr.mxu0 0.0
        %1095 = vmatpush1.msra.mxu0 0.0
        %1096 = vmatprep.subr.mxu0 0.0
        %1097 = vmatpush1.msra.mxu0 0.0
        %1098 = vmatprep.subr.mxu0 0.0
        %1099 = vmatpush1.msra.mxu0 0.0
        %1100 = vmatprep.subr.mxu0 0.0
        %1101 = vmatpush1.msra.mxu0 0.0
        %1102 = vmatprep.subr.mxu0 0.0
        %1103 = vmatpush1.msra.mxu0 0.0
        %1104 = vmatprep.subr.mxu0 0.0
        %1105 = vmatpush1.msra.mxu0 0.0
        %1106 = vmatprep.subr.mxu0 0.0
        %1107 = vmatpush1.msra.mxu0 0.0
        %1108 = vmatprep.subr.mxu0 0.0
        %1109 = vmatpush1.msra.mxu0 0.0
        %1110 = vmatprep.subr.mxu0 0.0
        %1111 = vmatpush1.msra.mxu0 0.0
        %1112 = vmatprep.subr.mxu0 0.0
        %1113 = vmatpush1.msra.mxu0 0.0
        %1114 = vmatprep.subr.mxu0 0.0
        %1115 = vmatpush1.msra.mxu0 0.0
        %1116 = vmatprep.subr.mxu0 0.0
        %1117 = vmatpush1.msra.mxu0 0.0
        %1118 = vmatprep.subr.mxu0 0.0
        %1119 = vmatpush1.msra.mxu0 0.0
        %1120 = vmatprep.subr.mxu0 0.0
        %1121 = vmatpush1.msra.mxu0 0.0
        %1122 = vmatprep.subr.mxu0 0.0
        %1123 = vmatpush1.msra.mxu0 0.0
        %1124 = vmatprep.subr.mxu0 0.0
        %1125 = vmatpush1.msra.mxu0 0.0
        %1126 = vmatprep.subr.mxu0 0.0
        %1127 = vmatpush1.msra.mxu0 0.0
        %1128 = vmatprep.subr.mxu0 0.0
        %1129 = vmatpush1.msra.mxu0 0.0
        %1130 = vmatprep.subr.mxu0 0.0
        %1131 = vmatpush1.msra.mxu0 0.0
        %1132 = vmatprep.subr.mxu0 0.0
        %1133 = vmatpush1.msra.mxu0 0.0
        %1134 = vmatprep.subr.mxu0 0.0
        %1135 = vmatpush1.msra.mxu0 0.0
        %1136 = vmatprep.subr.mxu0 0.0
        %1137 = vmatpush1.msra.mxu0 0.0
        %1138 = vmatprep.subr.mxu0 0.0
        %1139 = vmatpush1.msra.mxu0 0.0
        %1140 = vmatprep.subr.mxu0 0.0
        %1141 = vmatpush1.msra.mxu0 0.0
        %1142 = vmatprep.subr.mxu0 0.0
        %1143 = vmatpush1.msra.mxu0 0.0
        %1144 = vmatprep.subr.mxu0 0.0
        %1145 = vmatpush1.msra.mxu0 0.0
        %1146 = vmatprep.mubr.f32.mxu0 0.0
        %1147 = vmatmul.mubr.f32.gmra.mrb[0].mxu0 %v1059
        %v1148 = vpop.f32.mrb[0].mxu0
        %v1149 = vadd.f32 0.0, %v1148
        %v1150 = vpop.f32.mrb[0].mxu0
        %1151 = vmatprep.mubr.f32.mxu0 0.0
        %1152 = vmatmul.mubr.f32.gmra.mrb[0].mxu0 %v1062
        %v1153 = vpop.f32.mrb[0].mxu0
        %v1154 = vadd.f32 0.0, %v1153
        %v1155 = vpop.f32.mrb[0].mxu0
        %1156 = vmatprep.mubr.f32.mxu0 0.0
        %1157 = vmatmul.mubr.f32.gmra.mrb[0].mxu0 %v1065
        %v1158 = vpop.f32.mrb[0].mxu0
        %v1159 = vadd.f32 0.0, %v1158
        %v1160 = vpop.f32.mrb[0].mxu0
        %1161 = vmatprep.mubr.f32.mxu0 0.0
        %1162 = vmatmul.mubr.f32.gmra.mrb[0].mxu0 %v1068
        %v1163 = vpop.f32.mrb[0].mxu0
        %v1164 = vadd.f32 0.0, %v1163
        %v1165 = vpop.f32.mrb[0].mxu0
        %1166 = vmatprep.mubr.f32.mxu0 0.0
        %1167 = vmatmul.mubr.f32.gmra.mrb[0].mxu0 %v1071
        %v1168 = vpop.f32.mrb[0].mxu0
        %v1169 = vadd.f32 0.0, %v1168
        %v1170 = vpop.f32.mrb[0].mxu0
        %1171 = vmatprep.mubr.f32.mxu0 0.0
        %1172 = vmatmul.mubr.f32.gmra.mrb[0].mxu0 %v1074
        %v1173 = vpop.f32.mrb[0].mxu0
        %v1174 = vadd.f32 0.0, %v1173
        %v1175 = vpop.f32.mrb[0].mxu0
        %1176 = vmatprep.mubr.f32.mxu0 0.0
        %1177 = vmatmul.mubr.f32.gmra.mrb[0].mxu0 %v1077
        %v1178 = vpop.f32.mrb[0].mxu0
        %v1179 = vadd.f32 0.0, %v1178
        %v1180 = vpop.f32.mrb[0].mxu0
        %1181 = vdwg.mxu0
        %v1182 = vadd.f32 %v1035, %v1149
        %v1183 = vadd.f32 %v1036, %v1154
        %v1184 = vadd.f32 %v1037, %v1159
        %v1185 = vadd.f32 %v1038, %v1164
        %v1186 = vadd.f32 %v1039, %v1169
        %v1187 = vadd.f32 %v1040, %v1174
        %v1188 = vadd.f32 %v1041, %v1179
        %s1189 = scalar_lea.vmem %s1042, 1
        %v1190 = vld [vmem:[%s1189] ss:$2 sm:$0xff]
        %s1191 = scalar_lea.vmem %s1042, 49
        %v1192 = vld [vmem:[%s1191] ss:$2 sm:$0xff]
        %s1193 = scalar_lea.vmem %s1042, 97
        %v1194 = vld [vmem:[%s1193] ss:$2 sm:$0xff]
        %s1195 = scalar_lea.vmem %s1042, 145
        %v1196 = vld [vmem:[%s1195] ss:$2 sm:$0xff]
        %s1197 = scalar_lea.vmem %s1042, 193
        %v1198 = vld [vmem:[%s1197] ss:$2 sm:$0xff]
        %s1199 = scalar_lea.vmem %s1042, 241
        %v1200 = vld [vmem:[%s1199] ss:$2 sm:$0xff]
        %s1201 = scalar_lea.vmem %s1042, 289
        %v1202 = vld [vmem:[%s1201] ss:$2 sm:$0xff]
        %s1203 = scalar_lea.vmem %s172, 28
        %v1204 = vld [vmem:[%s1203] sm:$0xf]
        %v1206 = vsel %vm204, %v1190, 0
        %v1209 = vsel %vm204, %v1192, 0
        %v1212 = vsel %vm204, %v1194, 0
        %v1215 = vsel %vm204, %v1196, 0
        %v1218 = vsel %vm204, %v1198, 0
        %v1221 = vsel %vm204, %v1200, 0
        %v1224 = vsel %vm204, %v1202, 0
        %v1227 = vsel %vm226, %v1204, 0
        %1229 = vmatprep.subr.mxu0 0.0
        %1230 = vmatpush1.msra.mxu0 %v1227
        %1231 = vmatprep.subr.mxu0 0.0
        %1232 = vmatpush1.msra.mxu0 0.0
        %1233 = vmatprep.subr.mxu0 0.0
        %1234 = vmatpush1.msra.mxu0 0.0
        %1235 = vmatprep.subr.mxu0 0.0
        %1236 = vmatpush1.msra.mxu0 0.0
        %1237 = vmatprep.subr.mxu0 0.0
        %1238 = vmatpush1.msra.mxu0 0.0
        %1239 = vmatprep.subr.mxu0 0.0
        %1240 = vmatpush1.msra.mxu0 0.0
        %1241 = vmatprep.subr.mxu0 0.0
        %1242 = vmatpush1.msra.mxu0 0.0
        %1243 = vmatprep.subr.mxu0 0.0
        %1244 = vmatpush1.msra.mxu0 0.0
        %1245 = vmatprep.subr.mxu0 0.0
        %1246 = vmatpush1.msra.mxu0 0.0
        %1247 = vmatprep.subr.mxu0 0.0
        %1248 = vmatpush1.msra.mxu0 0.0
        %1249 = vmatprep.subr.mxu0 0.0
        %1250 = vmatpush1.msra.mxu0 0.0
        %1251 = vmatprep.subr.mxu0 0.0
        %1252 = vmatpush1.msra.mxu0 0.0
        %1253 = vmatprep.subr.mxu0 0.0
        %1254 = vmatpush1.msra.mxu0 0.0
        %1255 = vmatprep.subr.mxu0 0.0
        %1256 = vmatpush1.msra.mxu0 0.0
        %1257 = vmatprep.subr.mxu0 0.0
        %1258 = vmatpush1.msra.mxu0 0.0
        %1259 = vmatprep.subr.mxu0 0.0
        %1260 = vmatpush1.msra.mxu0 0.0
        %1261 = vmatprep.subr.mxu0 0.0
        %1262 = vmatpush1.msra.mxu0 0.0
        %1263 = vmatprep.subr.mxu0 0.0
        %1264 = vmatpush1.msra.mxu0 0.0
        %1265 = vmatprep.subr.mxu0 0.0
        %1266 = vmatpush1.msra.mxu0 0.0
        %1267 = vmatprep.subr.mxu0 0.0
        %1268 = vmatpush1.msra.mxu0 0.0
        %1269 = vmatprep.subr.mxu0 0.0
        %1270 = vmatpush1.msra.mxu0 0.0
        %1271 = vmatprep.subr.mxu0 0.0
        %1272 = vmatpush1.msra.mxu0 0.0
        %1273 = vmatprep.subr.mxu0 0.0
        %1274 = vmatpush1.msra.mxu0 0.0
        %1275 = vmatprep.subr.mxu0 0.0
        %1276 = vmatpush1.msra.mxu0 0.0
        %1277 = vmatprep.subr.mxu0 0.0
        %1278 = vmatpush1.msra.mxu0 0.0
        %1279 = vmatprep.subr.mxu0 0.0
        %1280 = vmatpush1.msra.mxu0 0.0
        %1281 = vmatprep.subr.mxu0 0.0
        %1282 = vmatpush1.msra.mxu0 0.0
        %1283 = vmatprep.subr.mxu0 0.0
        %1284 = vmatpush1.msra.mxu0 0.0
        %1285 = vmatprep.subr.mxu0 0.0
        %1286 = vmatpush1.msra.mxu0 0.0
        %1287 = vmatprep.subr.mxu0 0.0
        %1288 = vmatpush1.msra.mxu0 0.0
        %1289 = vmatprep.subr.mxu0 0.0
        %1290 = vmatpush1.msra.mxu0 0.0
        %1291 = vmatprep.subr.mxu0 0.0
        %1292 = vmatpush1.msra.mxu0 0.0
        %1293 = vmatprep.mubr.f32.mxu0 0.0
        %1294 = vmatmul.mubr.f32.gmra.mrb[0].mxu0 %v1206
        %v1295 = vpop.f32.mrb[0].mxu0
        %v1296 = vadd.f32 0.0, %v1295
        %v1297 = vpop.f32.mrb[0].mxu0
        %1298 = vmatprep.mubr.f32.mxu0 0.0
        %1299 = vmatmul.mubr.f32.gmra.mrb[0].mxu0 %v1209
        %v1300 = vpop.f32.mrb[0].mxu0
        %v1301 = vadd.f32 0.0, %v1300
        %v1302 = vpop.f32.mrb[0].mxu0
        %1303 = vmatprep.mubr.f32.mxu0 0.0
        %1304 = vmatmul.mubr.f32.gmra.mrb[0].mxu0 %v1212
        %v1305 = vpop.f32.mrb[0].mxu0
        %v1306 = vadd.f32 0.0, %v1305
        %v1307 = vpop.f32.mrb[0].mxu0
        %1308 = vmatprep.mubr.f32.mxu0 0.0
        %1309 = vmatmul.mubr.f32.gmra.mrb[0].mxu0 %v1215
        %v1310 = vpop.f32.mrb[0].mxu0
        %v1311 = vadd.f32 0.0, %v1310
        %v1312 = vpop.f32.mrb[0].mxu0
        %1313 = vmatprep.mubr.f32.mxu0 0.0
        %1314 = vmatmul.mubr.f32.gmra.mrb[0].mxu0 %v1218
        %v1315 = vpop.f32.mrb[0].mxu0
        %v1316 = vadd.f32 0.0, %v1315
        %v1317 = vpop.f32.mrb[0].mxu0
        %1318 = vmatprep.mubr.f32.mxu0 0.0
        %1319 = vmatmul.mubr.f32.gmra.mrb[0].mxu0 %v1221
        %v1320 = vpop.f32.mrb[0].mxu0
        %v1321 = vadd.f32 0.0, %v1320
        %v1322 = vpop.f32.mrb[0].mxu0
        %1323 = vmatprep.mubr.f32.mxu0 0.0
        %1324 = vmatmul.mubr.f32.gmra.mrb[0].mxu0 %v1224
        %v1325 = vpop.f32.mrb[0].mxu0
        %v1326 = vadd.f32 0.0, %v1325
        %v1327 = vpop.f32.mrb[0].mxu0
        %1328 = vdwg.mxu0
        %v1329 = vadd.f32 %v1182, %v1296
        %v1330 = vadd.f32 %v1183, %v1301
        %v1331 = vadd.f32 %v1184, %v1306
        %v1332 = vadd.f32 %v1185, %v1311
        %v1333 = vadd.f32 %v1186, %v1316
        %v1334 = vadd.f32 %v1187, %v1321
        %v1335 = vadd.f32 %v1188, %v1326
        %s1336 = scalar_lea.vmem %s1042, 2
        %v1337 = vld [vmem:[%s1336] ss:$2 sm:$0xff]
        %s1338 = scalar_lea.vmem %s1042, 50
        %v1339 = vld [vmem:[%s1338] ss:$2 sm:$0xff]
        %s1340 = scalar_lea.vmem %s1042, 98
        %v1341 = vld [vmem:[%s1340] ss:$2 sm:$0xff]
        %s1342 = scalar_lea.vmem %s1042, 146
        %v1343 = vld [vmem:[%s1342] ss:$2 sm:$0xff]
        %s1344 = scalar_lea.vmem %s1042, 194
        %v1345 = vld [vmem:[%s1344] ss:$2 sm:$0xff]
        %s1346 = scalar_lea.vmem %s1042, 242
        %v1347 = vld [vmem:[%s1346] ss:$2 sm:$0xff]
        %s1348 = scalar_lea.vmem %s1042, 290
        %v1349 = vld [vmem:[%s1348] ss:$2 sm:$0xff]
        %s1350 = scalar_lea.vmem %s172, 32
        %v1351 = vld [vmem:[%s1350] sm:$0xf]
        %v1353 = vsel %vm204, %v1337, 0
        %v1356 = vsel %vm204, %v1339, 0
        %v1359 = vsel %vm204, %v1341, 0
        %v1362 = vsel %vm204, %v1343, 0
        %v1365 = vsel %vm204, %v1345, 0
        %v1368 = vsel %vm204, %v1347, 0
        %v1371 = vsel %vm204, %v1349, 0
        %v1374 = vsel %vm226, %v1351, 0
        %1376 = vmatprep.subr.mxu0 0.0
        %1377 = vmatpush1.msra.mxu0 %v1374
        %1378 = vmatprep.subr.mxu0 0.0
        %1379 = vmatpush1.msra.mxu0 0.0
        %1380 = vmatprep.subr.mxu0 0.0
        %1381 = vmatpush1.msra.mxu0 0.0
        %1382 = vmatprep.subr.mxu0 0.0
        %1383 = vmatpush1.msra.mxu0 0.0
        %1384 = vmatprep.subr.mxu0 0.0
        %1385 = vmatpush1.msra.mxu0 0.0
        %1386 = vmatprep.subr.mxu0 0.0
        %1387 = vmatpush1.msra.mxu0 0.0
        %1388 = vmatprep.subr.mxu0 0.0
        %1389 = vmatpush1.msra.mxu0 0.0
        %1390 = vmatprep.subr.mxu0 0.0
        %1391 = vmatpush1.msra.mxu0 0.0
        %1392 = vmatprep.subr.mxu0 0.0
        %1393 = vmatpush1.msra.mxu0 0.0
        %1394 = vmatprep.subr.mxu0 0.0
        %1395 = vmatpush1.msra.mxu0 0.0
        %1396 = vmatprep.subr.mxu0 0.0
        %1397 = vmatpush1.msra.mxu0 0.0
        %1398 = vmatprep.subr.mxu0 0.0
        %1399 = vmatpush1.msra.mxu0 0.0
        %1400 = vmatprep.subr.mxu0 0.0
        %1401 = vmatpush1.msra.mxu0 0.0
        %1402 = vmatprep.subr.mxu0 0.0
        %1403 = vmatpush1.msra.mxu0 0.0
        %1404 = vmatprep.subr.mxu0 0.0
        %1405 = vmatpush1.msra.mxu0 0.0
        %1406 = vmatprep.subr.mxu0 0.0
        %1407 = vmatpush1.msra.mxu0 0.0
        %1408 = vmatprep.subr.mxu0 0.0
        %1409 = vmatpush1.msra.mxu0 0.0
        %1410 = vmatprep.subr.mxu0 0.0
        %1411 = vmatpush1.msra.mxu0 0.0
        %1412 = vmatprep.subr.mxu0 0.0
        %1413 = vmatpush1.msra.mxu0 0.0
        %1414 = vmatprep.subr.mxu0 0.0
        %1415 = vmatpush1.msra.mxu0 0.0
        %1416 = vmatprep.subr.mxu0 0.0
        %1417 = vmatpush1.msra.mxu0 0.0
        %1418 = vmatprep.subr.mxu0 0.0
        %1419 = vmatpush1.msra.mxu0 0.0
        %1420 = vmatprep.subr.mxu0 0.0
        %1421 = vmatpush1.msra.mxu0 0.0
        %1422 = vmatprep.subr.mxu0 0.0
        %1423 = vmatpush1.msra.mxu0 0.0
        %1424 = vmatprep.subr.mxu0 0.0
        %1425 = vmatpush1.msra.mxu0 0.0
        %1426 = vmatprep.subr.mxu0 0.0
        %1427 = vmatpush1.msra.mxu0 0.0
        %1428 = vmatprep.subr.mxu0 0.0
        %1429 = vmatpush1.msra.mxu0 0.0
        %1430 = vmatprep.subr.mxu0 0.0
        %1431 = vmatpush1.msra.mxu0 0.0
        %1432 = vmatprep.subr.mxu0 0.0
        %1433 = vmatpush1.msra.mxu0 0.0
        %1434 = vmatprep.subr.mxu0 0.0
        %1435 = vmatpush1.msra.mxu0 0.0
        %1436 = vmatprep.subr.mxu0 0.0
        %1437 = vmatpush1.msra.mxu0 0.0
        %1438 = vmatprep.subr.mxu0 0.0
        %1439 = vmatpush1.msra.mxu0 0.0
        %1440 = vmatprep.mubr.f32.mxu0 0.0
        %1441 = vmatmul.mubr.f32.gmra.mrb[0].mxu0 %v1353
        %v1442 = vpop.f32.mrb[0].mxu0
        %v1443 = vadd.f32 0.0, %v1442
        %v1444 = vpop.f32.mrb[0].mxu0
        %1445 = vmatprep.mubr.f32.mxu0 0.0
        %1446 = vmatmul.mubr.f32.gmra.mrb[0].mxu0 %v1356
        %v1447 = vpop.f32.mrb[0].mxu0
        %v1448 = vadd.f32 0.0, %v1447
        %v1449 = vpop.f32.mrb[0].mxu0
        %1450 = vmatprep.mubr.f32.mxu0 0.0
        %1451 = vmatmul.mubr.f32.gmra.mrb[0].mxu0 %v1359
        %v1452 = vpop.f32.mrb[0].mxu0
        %v1453 = vadd.f32 0.0, %v1452
        %v1454 = vpop.f32.mrb[0].mxu0
        %1455 = vmatprep.mubr.f32.mxu0 0.0
        %1456 = vmatmul.mubr.f32.gmra.mrb[0].mxu0 %v1362
        %v1457 = vpop.f32.mrb[0].mxu0
        %v1458 = vadd.f32 0.0, %v1457
        %v1459 = vpop.f32.mrb[0].mxu0
        %1460 = vmatprep.mubr.f32.mxu0 0.0
        %1461 = vmatmul.mubr.f32.gmra.mrb[0].mxu0 %v1365
        %v1462 = vpop.f32.mrb[0].mxu0
        %v1463 = vadd.f32 0.0, %v1462
        %v1464 = vpop.f32.mrb[0].mxu0
        %1465 = vmatprep.mubr.f32.mxu0 0.0
        %1466 = vmatmul.mubr.f32.gmra.mrb[0].mxu0 %v1368
        %v1467 = vpop.f32.mrb[0].mxu0
        %v1468 = vadd.f32 0.0, %v1467
        %v1469 = vpop.f32.mrb[0].mxu0
        %1470 = vmatprep.mubr.f32.mxu0 0.0
        %1471 = vmatmul.mubr.f32.gmra.mrb[0].mxu0 %v1371
        %v1472 = vpop.f32.mrb[0].mxu0
        %v1473 = vadd.f32 0.0, %v1472
        %v1474 = vpop.f32.mrb[0].mxu0
        %1475 = vdwg.mxu0
        %v1476 = vadd.f32 %v1329, %v1443
        %v1477 = vadd.f32 %v1330, %v1448
        %v1478 = vadd.f32 %v1331, %v1453
        %v1479 = vadd.f32 %v1332, %v1458
        %v1480 = vadd.f32 %v1333, %v1463
        %v1481 = vadd.f32 %v1334, %v1468
        %v1482 = vadd.f32 %v1335, %v1473
        %1483 = vst [vmem:[%s163] sm:$0xff] %v1476
        %1484 = vst [vmem:[%s163 + $0x8] sm:$0xff] %v1477
        %1485 = vst [vmem:[%s163 + $0x10] sm:$0xff] %v1478
        %1486 = vst [vmem:[%s163 + $0x18] sm:$0xff] %v1479
        %1487 = vst [vmem:[%s163 + $0x20] sm:$0xff] %v1480
        %1488 = vst [vmem:[%s163 + $0x28] sm:$0xff] %v1481
        %1489 = vst [vmem:[%s163 + $0x30] sm:$0xff] %v1482
        %s1490 = sand.u32 %s90, 1
        %s1491 = scalar_lea.sflag [#allocation3], %s1490
        %s1492 = sand.u32 %s90, 1
        %s1493 = smul.addr %s1492, 56
        %s1494 = scalar_lea.vmem [#allocation2], %s1493
        // Predicated region
        $region29: #{tpu_custom_call.1} parent=27 // pred_check
          %p1495 = pneg %p100
        $region30: #{tpu_custom_call.1} parent=27 // pred_check_branch
          %1497 = sbr.rel (%p1495) target = $region32
        $region31: #{tpu_custom_call.1} parent=27 // pred_region
          %s1498 = smul.u32 7, %s21
          %s1500 = ssub.s32 896, 896
          %1501 = vsyncadd %s1491, %s1500
          %s1502 = sadd.s32 %s20, %s1498
          %s1503 = smul.addr %s1502, 128
          %s1504 = scalar_lea.hbm %s2, %s1503
          %s1505 = sshll.u32 %s1494, 4
          %s1506 = int_to_ptr.vmem [resolvable:$true] %s1505
          %1511 = dma.vmem_to_hbm [thread:$0]  %s1506, 896, %s1504, %s1491, 128, 128, 8
        $region32: #{tpu_custom_call.1} parent=27 // pred_fallthru
          _
      $region28: #{tpu_custom_call.1} parent=5 // pred_fallthru
        _
      %p1512 = scmp.le.s32.totalorder 2, %s11
      // Predicated region
      $region33: #{tpu_custom_call.1} parent=5 // pred_check
        %p1513 = pneg %p1512
      $region34: #{tpu_custom_call.1} parent=5 // pred_check_branch
        %1515 = sbr.rel (%p1513) target = $region36
      $region35: #{tpu_custom_call.1} parent=5 // pred_region
        %s1516 = ssub.s32 %s11, 2
        // Predicated region
        $region37: #{tpu_custom_call.1} parent=35 // pred_check
          %p1517 = pneg %p106
        $region38: #{tpu_custom_call.1} parent=35 // pred_check_branch
          %1519 = sbr.rel (%p1517) target = $region40
        $region39: #{tpu_custom_call.1} parent=35 // pred_region
          %s1520 = sand.u32 %s91, 1
          %s1521 = scalar_lea.sflag [#allocation3], %s1520
          %s1522 = sand.u32 %s91, 1
          %s1523 = smul.addr %s1522, 56
          %s1524 = scalar_lea.vmem [#allocation2], %s1523
          %1525 = dma.done %s1521, 896
        $region40: #{tpu_custom_call.1} parent=35 // pred_fallthru
          _
      $region36: #{tpu_custom_call.1} parent=5 // pred_fallthru
        _
    $region6: #{tpu_custom_call.1} parent=1 // loop_footer
      %s15 = sadd.s32 1, %s11
    $region7: #{tpu_custom_call.1} parent=1 // loop_footer_branch
      %10 = sbr.rel target = $region3
    $region8: #{tpu_custom_call.1} parent=1 // loop_exit
      _
    %1526 = vsyncpa [#allocation3], 1
    %s1527 = scalar_lea.sflag [#allocation3], 1
    %1528 = vsyncpa %s1527, 1

// kernel: tpu_custom_call.1
$region0: #{tpu_custom_call.1}
  #allocation0 [shape = 'u32[]', space=smem, size = 0x4, offset = 0x4, fixed_abs, tag = 'smem constant byte address 0x4 - core index']
  #allocation1 [shape = 'u32[144,128]{1,0:T(1,128)}', space=vmem, size = 0x12000, scoped, tag = 'internal scratch']
  #allocation2 [shape = 'f32[104,128]{1,0:T(8,128)}', space=vmem, size = 0xd000, scoped, tag = 'scratch operand']
  %s0 = inlined_call_operand.hbm [shape: f32[104,128], index: 0, kind: input, shape index: {}]
  %s1 = inlined_call_operand.hbm [shape: f32[128,128], index: 1, kind: input, shape index: {}]
  %s2 = inlined_call_operand.hbm [shape: f32[104,128], index: 2, kind: output, shape index: {}]
  %s3 = sld [smem:[#allocation0]]
  $region34: #{tpu_custom_call.1} parent=0
    _
  %s5 = ssub.s32 1, %s3
  %s6 = scalar_select 0, %s5, %s3
  $region1: #{tpu_custom_call.1} parent=0
    #allocation3 [shape = 'u8[53248]{0}', space=vmem, size = 0xd000, scoped, tag = 'input window, operand 0, single buffered']
    #allocation4 [shape = 's32[1]{0}', space=sflag, size = 0x4, scoped, tag = 'scoped memory for tpu_custom_call.1']
    #allocation5 [shape = 's32[1]{0}', space=sflag, size = 0x4, scoped, tag = 'scoped memory for tpu_custom_call.1']
    #allocation6 [shape = 'u8[65536]{0}', space=vmem, size = 0x10000, scoped, tag = 'input window, operand 1, single buffered']
    #allocation7 [shape = 's32[1]{0}', space=sflag, size = 0x4, scoped, tag = 'scoped memory for tpu_custom_call.1']
    #allocation8 [shape = 'u8[53248]{0}', space=vmem, size = 0xd000, scoped, tag = 'output window, operand 0, single buffered']
    %7 = vsyncpa [#allocation4], 0
    %8 = vsyncpa [#allocation7], 0
    %9 = vsyncpa [#allocation5], 0
    // Predicated region
    $region2: #{tpu_custom_call.1} parent=1 // pred_check
      _
    $region3: #{tpu_custom_call.1} parent=1 // pred_check_branch
      %11 = sbr.rel (0) target = $region5
    $region4: #{tpu_custom_call.1} parent=1 // pred_region
      %s13 = ssub.s32 1664, 1664
      %14 = vsyncadd [#allocation4], %s13
      %s15 = sshll.u32 [#allocation3], 4
      %s16 = int_to_ptr.vmem [resolvable:$true] %s15
      %21 = dma.hbm_to_vmem [thread:$0]  %s0, 1664, %s16, [#allocation4], 128, 128, 8
    $region5: #{tpu_custom_call.1} parent=1 // pred_fallthru
      _
    // Predicated region
    $region6: #{tpu_custom_call.1} parent=1 // pred_check
      _
    $region7: #{tpu_custom_call.1} parent=1 // pred_check_branch
      %23 = sbr.rel (0) target = $region9
    $region8: #{tpu_custom_call.1} parent=1 // pred_region
      %s25 = ssub.s32 2048, 2048
      %26 = vsyncadd [#allocation7], %s25
      %s27 = sshll.u32 [#allocation6], 4
      %s28 = int_to_ptr.vmem [resolvable:$true] %s27
      %33 = dma.hbm_to_vmem [thread:$0]  %s1, 2048, %s28, [#allocation7], 128, 128, 8
    $region9: #{tpu_custom_call.1} parent=1 // pred_fallthru
      _
    // Predicated region
    $region10: #{tpu_custom_call.1} parent=1 // pred_check
      _
    $region11: #{tpu_custom_call.1} parent=1 // pred_check_branch
      %35 = sbr.rel (0) target = $region13
    $region12: #{tpu_custom_call.1} parent=1 // pred_region
      %36 = dma.done [#allocation4], 1664
    $region13: #{tpu_custom_call.1} parent=1 // pred_fallthru
      _
    // Predicated region
    $region14: #{tpu_custom_call.1} parent=1 // pred_check
      _
    $region15: #{tpu_custom_call.1} parent=1 // pred_check_branch
      %38 = sbr.rel (0) target = $region17
    $region16: #{tpu_custom_call.1} parent=1 // pred_region
      %39 = dma.done [#allocation7], 2048
    $region17: #{tpu_custom_call.1} parent=1 // pred_fallthru
      _
    %p40 = scmp.eq.s32.totalorder 0, 0
    // Predicated region
    $region18: #{tpu_custom_call.1} parent=1 // pred_check
      %p41 = pneg %p40
    $region19: #{tpu_custom_call.1} parent=1 // pred_check_branch
      %43 = sbr.rel (%p41) target = $region21
    $region20: #{tpu_custom_call.1} parent=1 // pred_region
      %44 = vst [vmem:[#allocation2] sm:$0xff] 0.0
      %45 = vst [vmem:[#allocation2 + $0x8] sm:$0xff] 0.0
      %46 = vst [vmem:[#allocation2 + $0x10] sm:$0xff] 0.0
      %47 = vst [vmem:[#allocation2 + $0x18] sm:$0xff] 0.0
      %48 = vst [vmem:[#allocation2 + $0x20] sm:$0xff] 0.0
      %49 = vst [vmem:[#allocation2 + $0x28] sm:$0xff] 0.0
      %50 = vst [vmem:[#allocation2 + $0x30] sm:$0xff] 0.0
      %51 = vst [vmem:[#allocation2 + $0x38] sm:$0xff] 0.0
      %52 = vst [vmem:[#allocation2 + $0x40] sm:$0xff] 0.0
      %53 = vst [vmem:[#allocation2 + $0x48] sm:$0xff] 0.0
      %54 = vst [vmem:[#allocation2 + $0x50] sm:$0xff] 0.0
      %55 = vst [vmem:[#allocation2 + $0x58] sm:$0xff] 0.0
      %56 = vst [vmem:[#allocation2 + $0x60] sm:$0xff] 0.0
    $region21: #{tpu_custom_call.1} parent=1 // pred_fallthru
      _
    %v57 = vld [vmem:[#allocation2] sm:$0xff]
    %v58 = vld [vmem:[#allocation2 + $0x8] sm:$0xff]
    %v59 = vld [vmem:[#allocation2 + $0x10] sm:$0xff]
    %v60 = vld [vmem:[#allocation2 + $0x18] sm:$0xff]
    %v61 = vld [vmem:[#allocation2 + $0x20] sm:$0xff]
    %v62 = vld [vmem:[#allocation2 + $0x28] sm:$0xff]
    %v63 = vld [vmem:[#allocation2 + $0x30] sm:$0xff]
    %v64 = vld [vmem:[#allocation2 + $0x38] sm:$0xff]
    %v65 = vld [vmem:[#allocation2 + $0x40] sm:$0xff]
    %v66 = vld [vmem:[#allocation2 + $0x48] sm:$0xff]
    %v67 = vld [vmem:[#allocation2 + $0x50] sm:$0xff]
    %v68 = vld [vmem:[#allocation2 + $0x58] sm:$0xff]
    %v69 = vld [vmem:[#allocation2 + $0x60] sm:$0xff]
    %v70 = vld [vmem:[#allocation3] sm:$0xff]
    %v71 = vld [vmem:[#allocation3 + $0x8] sm:$0xff]
    %v72 = vld [vmem:[#allocation3 + $0x10] sm:$0xff]
    %v73 = vld [vmem:[#allocation3 + $0x18] sm:$0xff]
    %v74 = vld [vmem:[#allocation3 + $0x20] sm:$0xff]
    %v75 = vld [vmem:[#allocation3 + $0x28] sm:$0xff]
    %v76 = vld [vmem:[#allocation3 + $0x30] sm:$0xff]
    %v77 = vld [vmem:[#allocation3 + $0x38] sm:$0xff]
    %v78 = vld [vmem:[#allocation3 + $0x40] sm:$0xff]
    %v79 = vld [vmem:[#allocation3 + $0x48] sm:$0xff]
    %v80 = vld [vmem:[#allocation3 + $0x50] sm:$0xff]
    %v81 = vld [vmem:[#allocation3 + $0x58] sm:$0xff]
    %v82 = vld [vmem:[#allocation3 + $0x60] sm:$0xff]
    %v83 = vld [vmem:[#allocation6] sm:$0xff]
    %v84 = vld [vmem:[#allocation6 + $0x8] sm:$0xff]
    %v85 = vld [vmem:[#allocation6 + $0x10] sm:$0xff]
    %v86 = vld [vmem:[#allocation6 + $0x18] sm:$0xff]
    %v87 = vld [vmem:[#allocation6 + $0x20] sm:$0xff]
    %v88 = vld [vmem:[#allocation6 + $0x28] sm:$0xff]
    %v89 = vld [vmem:[#allocation6 + $0x30] sm:$0xff]
    %v90 = vld [vmem:[#allocation6 + $0x38] sm:$0xff]
    %v91 = vld [vmem:[#allocation6 + $0x40] sm:$0xff]
    %v92 = vld [vmem:[#allocation6 + $0x48] sm:$0xff]
    %v93 = vld [vmem:[#allocation6 + $0x50] sm:$0xff]
    %v94 = vld [vmem:[#allocation6 + $0x58] sm:$0xff]
    %v95 = vld [vmem:[#allocation6 + $0x60] sm:$0xff]
    %v96 = vld [vmem:[#allocation6 + $0x68] sm:$0xff]
    %v97 = vld [vmem:[#allocation6 + $0x70] sm:$0xff]
    %v98 = vld [vmem:[#allocation6 + $0x78] sm:$0xff]
    %99 = vmatprep.subr.mxu0 0.0
    %100 = vmatpush1.msra.mxu0 %v83
    %101 = vmatprep.subr.mxu0 0.0
    %102 = vmatpush1.msra.mxu0 %v84
    %103 = vmatprep.subr.mxu0 0.0
    %104 = vmatpush1.msra.mxu0 %v85
    %105 = vmatprep.subr.mxu0 0.0
    %106 = vmatpush1.msra.mxu0 %v86
    %107 = vmatprep.subr.mxu0 0.0
    %108 = vmatpush1.msra.mxu0 %v87
    %109 = vmatprep.subr.mxu0 0.0
    %110 = vmatpush1.msra.mxu0 %v88
    %111 = vmatprep.subr.mxu0 0.0
    %112 = vmatpush1.msra.mxu0 %v89
    %113 = vmatprep.subr.mxu0 0.0
    %114 = vmatpush1.msra.mxu0 %v90
    %115 = vmatprep.subr.mxu0 0.0
    %116 = vmatpush1.msra.mxu0 %v91
    %117 = vmatprep.subr.mxu0 0.0
    %118 = vmatpush1.msra.mxu0 %v92
    %119 = vmatprep.subr.mxu0 0.0
    %120 = vmatpush1.msra.mxu0 %v93
    %121 = vmatprep.subr.mxu0 0.0
    %122 = vmatpush1.msra.mxu0 %v94
    %123 = vmatprep.subr.mxu0 0.0
    %124 = vmatpush1.msra.mxu0 %v95
    %125 = vmatprep.subr.mxu0 0.0
    %126 = vmatpush1.msra.mxu0 %v96
    %127 = vmatprep.subr.mxu0 0.0
    %128 = vmatpush1.msra.mxu0 %v97
    %129 = vmatprep.subr.mxu0 0.0
    %130 = vmatpush1.msra.mxu0 %v98
    %131 = vmatprep.subr.mxu0 0.0
    %132 = vmatpush1.msra.mxu0 0.0
    %133 = vmatprep.subr.mxu0 0.0
    %134 = vmatpush1.msra.mxu0 0.0
    %135 = vmatprep.subr.mxu0 0.0
    %136 = vmatpush1.msra.mxu0 0.0
    %137 = vmatprep.subr.mxu0 0.0
    %138 = vmatpush1.msra.mxu0 0.0
    %139 = vmatprep.subr.mxu0 0.0
    %140 = vmatpush1.msra.mxu0 0.0
    %141 = vmatprep.subr.mxu0 0.0
    %142 = vmatpush1.msra.mxu0 0.0
    %143 = vmatprep.subr.mxu0 0.0
    %144 = vmatpush1.msra.mxu0 0.0
    %145 = vmatprep.subr.mxu0 0.0
    %146 = vmatpush1.msra.mxu0 0.0
    %147 = vmatprep.subr.mxu0 0.0
    %148 = vmatpush1.msra.mxu0 0.0
    %149 = vmatprep.subr.mxu0 0.0
    %150 = vmatpush1.msra.mxu0 0.0
    %151 = vmatprep.subr.mxu0 0.0
    %152 = vmatpush1.msra.mxu0 0.0
    %153 = vmatprep.subr.mxu0 0.0
    %154 = vmatpush1.msra.mxu0 0.0
    %155 = vmatprep.subr.mxu0 0.0
    %156 = vmatpush1.msra.mxu0 0.0
    %157 = vmatprep.subr.mxu0 0.0
    %158 = vmatpush1.msra.mxu0 0.0
    %159 = vmatprep.subr.mxu0 0.0
    %160 = vmatpush1.msra.mxu0 0.0
    %161 = vmatprep.subr.mxu0 0.0
    %162 = vmatpush1.msra.mxu0 0.0
    %163 = vmatprep.mubr.f32.mxu0 0.0
    %164 = vmatmul.mubr.f32.gmra.mrb[0].mxu0 %v70
    %v165 = vpop.f32.mrb[0].mxu0
    %v166 = vadd.f32 0.0, %v165
    %v167 = vpop.f32.mrb[0].mxu0
    %168 = vmatprep.mubr.f32.mxu0 0.0
    %169 = vmatmul.mubr.f32.gmra.mrb[0].mxu0 %v71
    %v170 = vpop.f32.mrb[0].mxu0
    %v171 = vadd.f32 0.0, %v170
    %v172 = vpop.f32.mrb[0].mxu0
    %173 = vmatprep.mubr.f32.mxu0 0.0
    %174 = vmatmul.mubr.f32.gmra.mrb[0].mxu0 %v72
    %v175 = vpop.f32.mrb[0].mxu0
    %v176 = vadd.f32 0.0, %v175
    %v177 = vpop.f32.mrb[0].mxu0
    %178 = vmatprep.mubr.f32.mxu0 0.0
    %179 = vmatmul.mubr.f32.gmra.mrb[0].mxu0 %v73
    %v180 = vpop.f32.mrb[0].mxu0
    %v181 = vadd.f32 0.0, %v180
    %v182 = vpop.f32.mrb[0].mxu0
    %183 = vmatprep.mubr.f32.mxu0 0.0
    %184 = vmatmul.mubr.f32.gmra.mrb[0].mxu0 %v74
    %v185 = vpop.f32.mrb[0].mxu0
    %v186 = vadd.f32 0.0, %v185
    %v187 = vpop.f32.mrb[0].mxu0
    %188 = vmatprep.mubr.f32.mxu0 0.0
    %189 = vmatmul.mubr.f32.gmra.mrb[0].mxu0 %v75
    %v190 = vpop.f32.mrb[0].mxu0
    %v191 = vadd.f32 0.0, %v190
    %v192 = vpop.f32.mrb[0].mxu0
    %193 = vmatprep.mubr.f32.mxu0 0.0
    %194 = vmatmul.mubr.f32.gmra.mrb[0].mxu0 %v76
    %v195 = vpop.f32.mrb[0].mxu0
    %v196 = vadd.f32 0.0, %v195
    %v197 = vpop.f32.mrb[0].mxu0
    %198 = vmatprep.mubr.f32.mxu0 0.0
    %199 = vmatmul.mubr.f32.gmra.mrb[0].mxu0 %v77
    %v200 = vpop.f32.mrb[0].mxu0
    %v201 = vadd.f32 0.0, %v200
    %v202 = vpop.f32.mrb[0].mxu0
    %203 = vmatprep.mubr.f32.mxu0 0.0
    %204 = vmatmul.mubr.f32.gmra.mrb[0].mxu0 %v78
    %v205 = vpop.f32.mrb[0].mxu0
    %v206 = vadd.f32 0.0, %v205
    %v207 = vpop.f32.mrb[0].mxu0
    %208 = vmatprep.mubr.f32.mxu0 0.0
    %209 = vmatmul.mubr.f32.gmra.mrb[0].mxu0 %v79
    %v210 = vpop.f32.mrb[0].mxu0
    %v211 = vadd.f32 0.0, %v210
    %v212 = vpop.f32.mrb[0].mxu0
    %213 = vmatprep.mubr.f32.mxu0 0.0
    %214 = vmatmul.mubr.f32.gmra.mrb[0].mxu0 %v80
    %v215 = vpop.f32.mrb[0].mxu0
    %v216 = vadd.f32 0.0, %v215
    %v217 = vpop.f32.mrb[0].mxu0
    %218 = vmatprep.mubr.f32.mxu0 0.0
    %219 = vmatmul.mubr.f32.gmra.mrb[0].mxu0 %v81
    %v220 = vpop.f32.mrb[0].mxu0
    %v221 = vadd.f32 0.0, %v220
    %v222 = vpop.f32.mrb[0].mxu0
    %223 = vmatprep.mubr.f32.mxu0 0.0
    %224 = vmatmul.mubr.f32.gmra.mrb[0].mxu0 %v82
    %v225 = vpop.f32.mrb[0].mxu0
    %v226 = vadd.f32 0.0, %v225
    %v227 = vpop.f32.mrb[0].mxu0
    %228 = vdwg.mxu0
    %v229 = vadd.f32 %v57, %v166
    %v230 = vadd.f32 %v58, %v171
    %v231 = vadd.f32 %v59, %v176
    %v232 = vadd.f32 %v60, %v181
    %v233 = vadd.f32 %v61, %v186
    %v234 = vadd.f32 %v62, %v191
    %v235 = vadd.f32 %v63, %v196
    %v236 = vadd.f32 %v64, %v201
    %v237 = vadd.f32 %v65, %v206
    %v238 = vadd.f32 %v66, %v211
    %v239 = vadd.f32 %v67, %v216
    %v240 = vadd.f32 %v68, %v221
    %v241 = vadd.f32 %v69, %v226
    %242 = vst [vmem:[#allocation2] sm:$0xff] %v229
    %243 = vst [vmem:[#allocation2 + $0x8] sm:$0xff] %v230
    %244 = vst [vmem:[#allocation2 + $0x10] sm:$0xff] %v231
    %245 = vst [vmem:[#allocation2 + $0x18] sm:$0xff] %v232
    %246 = vst [vmem:[#allocation2 + $0x20] sm:$0xff] %v233
    %247 = vst [vmem:[#allocation2 + $0x28] sm:$0xff] %v234
    %248 = vst [vmem:[#allocation2 + $0x30] sm:$0xff] %v235
    %249 = vst [vmem:[#allocation2 + $0x38] sm:$0xff] %v236
    %250 = vst [vmem:[#allocation2 + $0x40] sm:$0xff] %v237
    %251 = vst [vmem:[#allocation2 + $0x48] sm:$0xff] %v238
    %252 = vst [vmem:[#allocation2 + $0x50] sm:$0xff] %v239
    %253 = vst [vmem:[#allocation2 + $0x58] sm:$0xff] %v240
    %254 = vst [vmem:[#allocation2 + $0x60] sm:$0xff] %v241
    // Predicated region
    $region22: #{tpu_custom_call.1} parent=1 // pred_check
      %p255 = pneg %p40
    $region23: #{tpu_custom_call.1} parent=1 // pred_check_branch
      %257 = sbr.rel (%p255) target = $region25
    $region24: #{tpu_custom_call.1} parent=1 // pred_region
      %v258 = vld [vmem:[#allocation2] sm:$0xff]
      %v259 = vld [vmem:[#allocation2 + $0x8] sm:$0xff]
      %v260 = vld [vmem:[#allocation2 + $0x10] sm:$0xff]
      %v261 = vld [vmem:[#allocation2 + $0x18] sm:$0xff]
      %v262 = vld [vmem:[#allocation2 + $0x20] sm:$0xff]
      %v263 = vld [vmem:[#allocation2 + $0x28] sm:$0xff]
      %v264 = vld [vmem:[#allocation2 + $0x30] sm:$0xff]
      %v265 = vld [vmem:[#allocation2 + $0x38] sm:$0xff]
      %v266 = vld [vmem:[#allocation2 + $0x40] sm:$0xff]
      %v267 = vld [vmem:[#allocation2 + $0x48] sm:$0xff]
      %v268 = vld [vmem:[#allocation2 + $0x50] sm:$0xff]
      %v269 = vld [vmem:[#allocation2 + $0x58] sm:$0xff]
      %v270 = vld [vmem:[#allocation2 + $0x60] sm:$0xff]
      %271 = vst [vmem:[#allocation8] sm:$0xff] %v258
      %272 = vst [vmem:[#allocation8 + $0x8] sm:$0xff] %v259
      %273 = vst [vmem:[#allocation8 + $0x10] sm:$0xff] %v260
      %274 = vst [vmem:[#allocation8 + $0x18] sm:$0xff] %v261
      %275 = vst [vmem:[#allocation8 + $0x20] sm:$0xff] %v262
      %276 = vst [vmem:[#allocation8 + $0x28] sm:$0xff] %v263
      %277 = vst [vmem:[#allocation8 + $0x30] sm:$0xff] %v264
      %278 = vst [vmem:[#allocation8 + $0x38] sm:$0xff] %v265
      %279 = vst [vmem:[#allocation8 + $0x40] sm:$0xff] %v266
      %280 = vst [vmem:[#allocation8 + $0x48] sm:$0xff] %v267
      %281 = vst [vmem:[#allocation8 + $0x50] sm:$0xff] %v268
      %282 = vst [vmem:[#allocation8 + $0x58] sm:$0xff] %v269
      %283 = vst [vmem:[#allocation8 + $0x60] sm:$0xff] %v270
    $region25: #{tpu_custom_call.1} parent=1 // pred_fallthru
      _
    // Predicated region
    $region26: #{tpu_custom_call.1} parent=1 // pred_check
      _
    $region27: #{tpu_custom_call.1} parent=1 // pred_check_branch
      %285 = sbr.rel (0) target = $region29
    $region28: #{tpu_custom_call.1} parent=1 // pred_region
      %s287 = ssub.s32 1664, 1664
      %288 = vsyncadd [#allocation5], %s287
      %s289 = sshll.u32 [#allocation8], 4
      %s290 = int_to_ptr.vmem [resolvable:$true] %s289
      %295 = dma.vmem_to_hbm [thread:$0]  %s290, 1664, %s2, [#allocation5], 128, 128, 8
    $region29: #{tpu_custom_call.1} parent=1 // pred_fallthru
      _
    // Predicated region
    $region30: #{tpu_custom_call.1} parent=1 // pred_check
      _
    $region31: #{tpu_custom_call.1} parent=1 // pred_check_branch
      %297 = sbr.rel (0) target = $region33
    $region32: #{tpu_custom_call.1} parent=1 // pred_region
      %298 = dma.done [#allocation5], 1664
    $region33: #{tpu_custom_call.1} parent=1 // pred_fallthru
      _
    %299 = vsyncpa [#allocation4], 1
    %300 = vsyncpa [#allocation7], 1
    %301 = vsyncpa [#allocation5], 1

</llo_original>
